<compile_context>
chip_gen: v6e
topology: v6e:2x2x1
jax: 0.10.0
libtpu: 0.0.40
codegen_flags: <defaults>
</compile_context>

<pallas_src>
import functools

import jax
import jax.numpy as jnp
from jax.experimental import pallas as pl
from jax.experimental.pallas import tpu as pltpu

NUM_FUTURE_STEPS = 8
FP_DIM = 3 * NUM_FUTURE_STEPS      # 24
HIDDEN = 32                        # feature dim of `h` out of the inner net
H1_SUM = 128 + 64 + 64             # concatenated head hidden width = 256
OUT_PAD = 128                      # lane-dense output slab width

_SQRT_2_OVER_PI = 0.7978845608028654


def _round_up(x, m):
    return ((x + m - 1) // m) * m


def _gelu(x):
    # tanh-approximation GELU -> tanh runs on the EUP (own bundle slot).
    # TODO(synk): PyTorch nn.GELU() default is the exact erf form (~1e-3 diff).
    return 0.5 * x * (1.0 + jnp.tanh(_SQRT_2_OVER_PI * (x + 0.044715 * x * x * x)))


# ------------------------------ Pallas kernels ------------------------------
def _forward_tile(frames_ref, xyz_ref, wf_ref, wx_ref, eb_ref,
                  w1_ref, b1_ref, w2_ref, b2_ref):
    """One batch tile: stand-in encoder + fused heads -> (b_tile, 128) slab."""
    # TODO(synk): the inner `net` is user-supplied in the PyTorch module; a
    # deterministic tanh-linear encoder stands in for it here.
    h_pre = jnp.dot(frames_ref[...].astype(jnp.bfloat16), wf_ref[...],
                    preferred_element_type=jnp.float32)
    h_pre = h_pre + jnp.dot(xyz_ref[...].astype(jnp.bfloat16), wx_ref[...],
                            preferred_element_type=jnp.float32)
    h = jnp.tanh(h_pre + eb_ref[...])                                  # (bt, 32) f32

    # Fused heads: one (bt,32)x(32,256) and one (bt,256)x(256,128) matmul.
    z = _gelu(jnp.dot(h.astype(jnp.bfloat16), w1_ref[...],
                      preferred_element_type=jnp.float32) + b1_ref[...])
    y = jnp.dot(z.astype(jnp.bfloat16), w2_ref[...],
                preferred_element_type=jnp.float32) + b2_ref[...]      # (bt, 128) f32
    return y


def _kernel_pred(frames_ref, xyz_ref, wf_ref, wx_ref, eb_ref,
                 w1_ref, b1_ref, w2_ref, b2_ref, out_ref):
    out_ref[...] = _forward_tile(frames_ref, xyz_ref, wf_ref, wx_ref, eb_ref,
                                 w1_ref, b1_ref, w2_ref, b2_ref)


def _kernel_pred_loss(frames_ref, xyz_ref, wf_ref, wx_ref, eb_ref,
                      w1_ref, b1_ref, w2_ref, b2_ref, tgt_ref,
                      out_ref, loss_ref, *, b_true, b_tile):
    y = _forward_tile(frames_ref, xyz_ref, wf_ref, wx_ref, eb_ref,
                      w1_ref, b1_ref, w2_ref, b2_ref)
    out_ref[...] = y

    # Fused loss: L1(future_path)/(B*24) + MSE(steering)/B + MSE(speed)/B,
    # computed as ONE cross-lane reduction over a pre-scaled contribution
    # tensor.  Padded batch rows are masked out; divisors use the true B.
    d = y - tgt_ref[...]                                               # (bt, 128)
    cols = jax.lax.broadcasted_iota(jnp.int32, d.shape, 1)
    rows = jax.lax.broadcasted_iota(jnp.int32, d.shape, 0) + pl.program_id(0) * b_tile
    inv_fp = 1.0 / float(b_true * FP_DIM)
    inv_b = 1.0 / float(b_true)
    scale = jnp.where(cols < FP_DIM, inv_fp,
                      jnp.where(cols < FP_DIM + 2, inv_b, 0.0))
    val = jnp.where(cols < FP_DIM, jnp.abs(d), d * d)
    contrib = jnp.where(rows < b_true, scale * val, 0.0)
    total = jnp.sum(contrib)                                           # per-tile partial
    # lane-dense row; partial sums combined (trivially, 1 tile here) in wrapper
    loss_ref[...] = jnp.broadcast_to(total, loss_ref.shape).astype(jnp.float32)


# --------------------------------- launcher ----------------------------------
def run_fused(params, frames, xyz, b_true, tgt_slab=None):
    """frames: (B_pad, Kf_pad) f32; xyz: (B_pad, Kx_pad) f32. Returns (slab, loss|None)."""
    b_pad, kf_pad = frames.shape
    kx_pad = xyz.shape[1]
    b_tile = b_pad if (b_pad <= 128 or b_pad % 128) else 128
    n_tiles = b_pad // b_tile

    const = lambda i: (0, 0)
    row = lambda i: (i, 0)

    in_specs = [
        pl.BlockSpec((b_tile, kf_pad), row),      # frames (full K, no K grid)
        pl.BlockSpec((b_tile, kx_pad), row),      # xyz    (full K)
        pl.BlockSpec((kf_pad, HIDDEN), const),    # enc W (frames part)
        pl.BlockSpec((kx_pad, HIDDEN), const),    # enc W (xyz part)
        pl.BlockSpec((1, HIDDEN), const),         # enc b
        pl.BlockSpec((HIDDEN, H1_SUM), const),    # W1 (concat heads)
        pl.BlockSpec((1, H1_SUM), const),         # b1 (concat heads)
        pl.BlockSpec((H1_SUM, OUT_PAD), const),   # W2 (block-diag, padded)
        pl.BlockSpec((1, OUT_PAD), const),        # b2 (concat + pad)
    ]
    args = [frames, xyz, params['wf'], params['wx'], params['enc_b'],
            params['w1'], params['b1'], params['w2'], params['b2']]
    cparams = pltpu.CompilerParams(
        dimension_semantics=("parallel",),        # batch axis -> 2nd TC on v7x
        vmem_limit_bytes=32 * 1024 * 1024)        # within scoped default on all gens

    if tgt_slab is None:
        out = pl.pallas_call(
            _kernel_pred,
            out_shape=jax.ShapeDtypeStruct((b_pad, OUT_PAD), jnp.float32),
            grid_spec=pltpu.PrefetchScalarGridSpec(
                num_scalar_prefetch=0, grid=(n_tiles,),
                in_specs=in_specs,
                out_specs=pl.BlockSpec((b_tile, OUT_PAD), row)),
            compiler_params=cparams,
        )(*args)
        return out, None

    kern = functools.partial(_kernel_pred_loss, b_true=b_true, b_tile=b_tile)
    out, loss_rows = pl.pallas_call(
        kern,
        out_shape=(jax.ShapeDtypeStruct((b_pad, OUT_PAD), jnp.float32),
                   jax.ShapeDtypeStruct((n_tiles, OUT_PAD), jnp.float32)),
        grid_spec=pltpu.PrefetchScalarGridSpec(
            num_scalar_prefetch=0, grid=(n_tiles,),
            in_specs=in_specs + [pl.BlockSpec((b_tile, OUT_PAD), row)],
            out_specs=(pl.BlockSpec((b_tile, OUT_PAD), row),
                       pl.BlockSpec((1, OUT_PAD), row))),
        compiler_params=cparams,
    )(*(args + [tgt_slab]))
    return out, jnp.sum(loss_rows[:, 0])


# ------------------------------- wrapper glue --------------------------------
def av_wrapper_forward(params, past_frames, past_xyz, targets=None, return_dict=True):
    B = past_frames.shape[0]

    # Reshape only (no concat, no full-size re-materialization of feat).
    frames = past_frames.reshape(B, -1)                       # (B, T*C*H*W) f32
    xyz = past_xyz.reshape(B, -1)                             # (B, T*3)     f32
    kf, kx = frames.shape[1], xyz.shape[1]
    kf_pad = params['wf'].shape[0]                            # multiple of 128
    kx_pad = params['wx'].shape[0]                            # 128
    b_pad = _round_up(max(B, 1), 8)                           # sublane-aligned batch

    pad_f = ((0, b_pad - B), (0, kf_pad - kf))
    if any(p != (0, 0) for p in pad_f):
        frames = jnp.pad(frames, pad_f)
    pad_x = ((0, b_pad - B), (0, kx_pad - kx))
    if any(p != (0, 0) for p in pad_x):
        xyz = jnp.pad(xyz, pad_x)

    tgt_slab = None
    if targets is not None:
        tgt_fp = targets['future_path'].reshape(B, -1).astype(jnp.float32)
        tgt_st = targets['steering_angle'].reshape(B, 1).astype(jnp.float32)
        tgt_sp = targets['speed'].reshape(B, 1).astype(jnp.float32)
        tgt_slab = jnp.concatenate(
            [tgt_fp, tgt_st, tgt_sp,
             jnp.zeros((B, OUT_PAD - (FP_DIM + 2)), jnp.float32)], axis=1)
        if b_pad != B:
            tgt_slab = jnp.pad(tgt_slab, ((0, b_pad - B), (0, 0)))

    out_slab, loss = run_fused(params, frames, xyz, B, tgt_slab)
    out_slab = out_slab[:B]

    future_path = out_slab[:, :FP_DIM].reshape(-1, NUM_FUTURE_STEPS, 3)
    # equivalent to .squeeze(-1): keeps the batch dim even when B == 1
    steering = out_slab[:, FP_DIM]
    speed = out_slab[:, FP_DIM + 1]

    if return_dict:
        pred = {'future_path': future_path, 'steering_angle': steering, 'speed': speed}
    else:
        empty_column = jnp.zeros((future_path.shape[0], 1, 1), dtype=future_path.dtype)
        new_row = jnp.concatenate(
            [steering.reshape(-1, 1, 1), speed.reshape(-1, 1, 1), empty_column], axis=2)
        pred = jnp.concatenate((future_path, new_row), axis=1)

    return pred, loss


# ----------------------------- deterministic init ----------------------------
def _linear_init(key, fan_in, fan_out):
    # torch.nn.Linear default: U(-1/sqrt(fan_in), 1/sqrt(fan_in)) for W and b
    kw, kb = jax.random.split(key)
    bound = 1.0 / (fan_in ** 0.5)
    w = jax.random.uniform(kw, (fan_in, fan_out), jnp.float32, -bound, bound)
    b = jax.random.uniform(kb, (1, fan_out), jnp.float32, -bound, bound)
    return w, b


def make_params(key, frames_in, xyz_in):
    ks = jax.random.split(key, 7)
    enc_in = frames_in + xyz_in
    enc_w, enc_b = _linear_init(ks[0], enc_in, HIDDEN)
    fp_w1, fp_b1 = _linear_init(ks[1], HIDDEN, 128)
    fp_w2, fp_b2 = _linear_init(ks[2], 128, FP_DIM)
    st_w1, st_b1 = _linear_init(ks[3], HIDDEN, 64)
    st_w2, st_b2 = _linear_init(ks[4], 64, 1)
    sp_w1, sp_b1 = _linear_init(ks[5], HIDDEN, 64)
    sp_w2, sp_b2 = _linear_init(ks[6], 64, 1)

    # Encoder weight split into frames / xyz parts, zero-padded along K to a
    # 128 multiple (not 512), stored bf16.
    kf_pad = _round_up(frames_in, 128)
    kx_pad = _round_up(xyz_in, 128)
    wf = jnp.zeros((kf_pad, HIDDEN), jnp.float32).at[:frames_in].set(enc_w[:frames_in])
    wx = jnp.zeros((kx_pad, HIDDEN), jnp.float32).at[:xyz_in].set(enc_w[frames_in:])

    # Heads layer-1: concat along output dim -> one (32, 256) matmul.
    w1_cat = jnp.concatenate([fp_w1, st_w1, sp_w1], axis=1)        # (32, 256)
    b1_cat = jnp.concatenate([fp_b1, st_b1, sp_b1], axis=1)        # (1, 256)

    # Heads layer-2: block-diagonal, padded to a lane-dense 128-wide slab.
    w2_cat = jnp.zeros((H1_SUM, OUT_PAD), jnp.float32)
    w2_cat = w2_cat.at[0:128, 0:FP_DIM].set(fp_w2)
    w2_cat = w2_cat.at[128:192, FP_DIM:FP_DIM + 1].set(st_w2)
    w2_cat = w2_cat.at[192:256, FP_DIM + 1:FP_DIM + 2].set(sp_w2)
    b2_cat = jnp.zeros((1, OUT_PAD), jnp.float32)
    b2_cat = b2_cat.at[:, 0:FP_DIM].set(fp_b2)
    b2_cat = b2_cat.at[:, FP_DIM:FP_DIM + 1].set(st_b2)
    b2_cat = b2_cat.at[:, FP_DIM + 1:FP_DIM + 2].set(sp_b2)

    return dict(
        wf=wf.astype(jnp.bfloat16), wx=wx.astype(jnp.bfloat16),
        enc_b=enc_b,                                               # (1, 32) f32
        w1=w1_cat.astype(jnp.bfloat16), b1=b1_cat,
        w2=w2_cat.astype(jnp.bfloat16), b2=b2_cat,
    )


# ----------------------------------- demo ------------------------------------
if __name__ == "__main__":
    key = jax.random.PRNGKey(0)
    k_param, k_frames, k_xyz, k_tgt = jax.random.split(key, 4)

    B, T, C, H, W = 2, 4, 3, 16, 16
    frames_in = T * C * H * W                      # 3072
    xyz_in = T * 3                                 # 12

    params = make_params(k_param, frames_in, xyz_in)

    past_frames = jax.random.normal(k_frames, (B, T, C, H, W), jnp.float32)
    past_xyz = jax.random.normal(k_xyz, (B, T, 3), jnp.float32)

    tk0, tk1, tk2 = jax.random.split(k_tgt, 3)
    targets = {
        'future_path': jax.random.normal(tk0, (B, NUM_FUTURE_STEPS, 3), jnp.float32),
        'steering_angle': jax.random.normal(tk1, (B,), jnp.float32),
        'speed': jax.random.normal(tk2, (B,), jnp.float32),
    }

    pred, loss = av_wrapper_forward(params, past_frames, past_xyz,
                                    targets=targets, return_dict=True)
    jax.block_until_ready((pred, loss))

    assert pred['future_path'].shape == (B, NUM_FUTURE_STEPS, 3)
    assert pred['steering_angle'].shape == (B,)
    assert pred['speed'].shape == (B,)
    assert loss.shape == ()

    # --- quick numeric check against a plain-JAX reference (same bf16 weights)
    frames_b = past_frames.reshape(B, -1).astype(jnp.bfloat16).astype(jnp.float32)
    xyz_b = past_xyz.reshape(B, -1).astype(jnp.bfloat16).astype(jnp.float32)
    wf_f = params['wf'][:frames_in].astype(jnp.float32)
    wx_f = params['wx'][:xyz_in].astype(jnp.float32)
    w1f = params['w1'].astype(jnp.float32)
    w2f = params['w2'].astype(jnp.float32)
    h_ref = jnp.tanh(frames_b @ wf_f + xyz_b @ wx_f + params['enc_b'])
    h_b = h_ref.astype(jnp.bfloat16).astype(jnp.float32)
    z_ref = _gelu(h_b @ w1f + params['b1'])
    z_b = z_ref.astype(jnp.bfloat16).astype(jnp.float32)
    y_ref = z_b @ w2f + params['b2']
    fp_ref = y_ref[:, :FP_DIM]
    st_ref = y_ref[:, FP_DIM]
    sp_ref = y_ref[:, FP_DIM + 1]
    loss_ref = (jnp.mean(jnp.abs(fp_ref.reshape(B, NUM_FUTURE_STEPS, 3)
                                 - targets['future_path']))
                + jnp.mean(jnp.square(st_ref - targets['steering_angle']))
                + jnp.mean(jnp.square(sp_ref - targets['speed'])))

    assert bool(jnp.allclose(pred['future_path'].reshape(B, -1), fp_ref,
                             atol=1e-2, rtol=1e-2))
    assert bool(jnp.allclose(pred['steering_angle'], st_ref, atol=1e-2, rtol=1e-2))
    assert bool(jnp.allclose(pred['speed'], sp_ref, atol=1e-2, rtol=1e-2))
    assert bool(jnp.allclose(loss, loss_ref, atol=1e-2, rtol=1e-2))

    print("KERNEL_OK")
</pallas_src>

<mosaic_0001>
module attributes {stable_mosaic.version = 11 : i64} {
  func.func @_kernel_pred_loss(%arg0: i32, %arg1: memref<8x3072xf32, #tpu.memory_space<vmem>>, %arg2: memref<8x128xf32, #tpu.memory_space<vmem>>, %arg3: memref<3072x32xbf16, #tpu.memory_space<vmem>>, %arg4: memref<128x32xbf16, #tpu.memory_space<vmem>>, %arg5: memref<1x32xf32, #tpu.memory_space<vmem>>, %arg6: memref<32x256xbf16, #tpu.memory_space<vmem>>, %arg7: memref<1x256xf32, #tpu.memory_space<vmem>>, %arg8: memref<256x128xbf16, #tpu.memory_space<vmem>>, %arg9: memref<1x128xf32, #tpu.memory_space<vmem>>, %arg10: memref<8x128xf32, #tpu.memory_space<vmem>>, %arg11: memref<8x128xf32, #tpu.memory_space<vmem>>, %arg12: memref<1x128xf32, #tpu.memory_space<vmem>>) attributes {dimension_semantics = [#tpu.dimension_semantics<parallel>], iteration_bounds = array<i64: 1>, scalar_prefetch = 0 : i64, scratch_operands = 0 : i64, tpu.core_type = #tpu.core_type<tc>, window_params = [{transform_indices = @transform_0, window_bounds = array<i64: 8, 3072>}, {transform_indices = @transform_1, window_bounds = array<i64: 8, 128>}, {pipeline_mode = #tpu.pipeline_mode<synchronous>, transform_indices = @transform_2, window_bounds = array<i64: 3072, 32>}, {pipeline_mode = #tpu.pipeline_mode<synchronous>, transform_indices = @transform_3, window_bounds = array<i64: 128, 32>}, {pipeline_mode = #tpu.pipeline_mode<synchronous>, transform_indices = @transform_4, window_bounds = array<i64: 1, 32>}, {pipeline_mode = #tpu.pipeline_mode<synchronous>, transform_indices = @transform_5, window_bounds = array<i64: 32, 256>}, {pipeline_mode = #tpu.pipeline_mode<synchronous>, transform_indices = @transform_6, window_bounds = array<i64: 1, 256>}, {pipeline_mode = #tpu.pipeline_mode<synchronous>, transform_indices = @transform_7, window_bounds = array<i64: 256, 128>}, {pipeline_mode = #tpu.pipeline_mode<synchronous>, transform_indices = @transform_8, window_bounds = array<i64: 1, 128>}, {transform_indices = @transform_9, window_bounds = array<i64: 8, 128>}, {transform_indices = @transform_10, window_bounds = array<i64: 8, 128>}, {transform_indices = @transform_11, window_bounds = array<i64: 1, 128>}]} {
    %c0 = arith.constant 0 : index
    %c0_0 = arith.constant 0 : index
    %0 = vector.load %arg1[%c0, %c0_0] : memref<8x3072xf32, #tpu.memory_space<vmem>>, vector<8x3072xf32>
    %1 = arith.truncf %0 : vector<8x3072xf32> to vector<8x3072xbf16>
    %c0_1 = arith.constant 0 : index
    %c0_2 = arith.constant 0 : index
    %2 = vector.load %arg3[%c0_1, %c0_2] : memref<3072x32xbf16, #tpu.memory_space<vmem>>, vector<3072x32xbf16>
    %cst = arith.constant dense<0.000000e+00> : vector<8x32xf32>
    %3 = tpu.matmul %1, %2, %cst {dimension_numbers = #tpu.dot_dimension_numbers<[1], [0], [0], [1], [0, 0, 1, 1], [], []>} : vector<8x3072xbf16>, vector<3072x32xbf16>, vector<8x32xf32> -> vector<8x32xf32>
    %c0_3 = arith.constant 0 : index
    %c0_4 = arith.constant 0 : index
    %4 = vector.load %arg2[%c0_3, %c0_4] : memref<8x128xf32, #tpu.memory_space<vmem>>, vector<8x128xf32>
    %5 = arith.truncf %4 : vector<8x128xf32> to vector<8x128xbf16>
    %c0_5 = arith.constant 0 : index
    %c0_6 = arith.constant 0 : index
    %6 = vector.load %arg4[%c0_5, %c0_6] : memref<128x32xbf16, #tpu.memory_space<vmem>>, vector<128x32xbf16>
    %cst_7 = arith.constant dense<0.000000e+00> : vector<8x32xf32>
    %7 = tpu.matmul %5, %6, %cst_7 {dimension_numbers = #tpu.dot_dimension_numbers<[1], [0], [0], [1], [0, 0, 1, 1], [], []>} : vector<8x128xbf16>, vector<128x32xbf16>, vector<8x32xf32> -> vector<8x32xf32>
    %8 = arith.addf %3, %7 : vector<8x32xf32>
    %c0_8 = arith.constant 0 : index
    %c0_9 = arith.constant 0 : index
    %9 = vector.load %arg5[%c0_8, %c0_9] : memref<1x32xf32, #tpu.memory_space<vmem>>, vector<1x32xf32>
    %10 = vector.broadcast %9 : vector<1x32xf32> to vector<8x32xf32>
    %11 = arith.addf %8, %10 : vector<8x32xf32>
    %12 = math.tanh %11 : vector<8x32xf32>
    %13 = arith.truncf %12 : vector<8x32xf32> to vector<8x32xbf16>
    %c0_10 = arith.constant 0 : index
    %c0_11 = arith.constant 0 : index
    %14 = vector.load %arg6[%c0_10, %c0_11] : memref<32x256xbf16, #tpu.memory_space<vmem>>, vector<32x256xbf16>
    %cst_12 = arith.constant dense<0.000000e+00> : vector<8x256xf32>
    %15 = tpu.matmul %13, %14, %cst_12 {dimension_numbers = #tpu.dot_dimension_numbers<[1], [0], [0], [1], [0, 0, 1, 1], [], []>} : vector<8x32xbf16>, vector<32x256xbf16>, vector<8x256xf32> -> vector<8x256xf32>
    %c0_13 = arith.constant 0 : index
    %c0_14 = arith.constant 0 : index
    %16 = vector.load %arg7[%c0_13, %c0_14] : memref<1x256xf32, #tpu.memory_space<vmem>>, vector<1x256xf32>
    %17 = vector.broadcast %16 : vector<1x256xf32> to vector<8x256xf32>
    %18 = arith.addf %15, %17 : vector<8x256xf32>
    %cst_15 = arith.constant 5.000000e-01 : f32
    %19 = vector.broadcast %cst_15 : f32 to vector<8x256xf32>
    %20 = arith.mulf %19, %18 : vector<8x256xf32>
    %cst_16 = arith.constant 4.471500e-02 : f32
    %21 = vector.broadcast %cst_16 : f32 to vector<8x256xf32>
    %22 = arith.mulf %21, %18 : vector<8x256xf32>
    %23 = arith.mulf %22, %18 : vector<8x256xf32>
    %24 = arith.mulf %23, %18 : vector<8x256xf32>
    %25 = arith.addf %18, %24 : vector<8x256xf32>
    %cst_17 = arith.constant 0.797884583 : f32
    %26 = vector.broadcast %cst_17 : f32 to vector<8x256xf32>
    %27 = arith.mulf %26, %25 : vector<8x256xf32>
    %28 = math.tanh %27 : vector<8x256xf32>
    %cst_18 = arith.constant 1.000000e+00 : f32
    %29 = vector.broadcast %cst_18 : f32 to vector<8x256xf32>
    %30 = arith.addf %29, %28 : vector<8x256xf32>
    %31 = arith.mulf %20, %30 : vector<8x256xf32>
    %32 = arith.truncf %31 : vector<8x256xf32> to vector<8x256xbf16>
    %c0_19 = arith.constant 0 : index
    %c0_20 = arith.constant 0 : index
    %33 = vector.load %arg8[%c0_19, %c0_20] : memref<256x128xbf16, #tpu.memory_space<vmem>>, vector<256x128xbf16>
    %cst_21 = arith.constant dense<0.000000e+00> : vector<8x128xf32>
    %34 = tpu.matmul %32, %33, %cst_21 {dimension_numbers = #tpu.dot_dimension_numbers<[1], [0], [0], [1], [0, 0, 1, 1], [], []>} : vector<8x256xbf16>, vector<256x128xbf16>, vector<8x128xf32> -> vector<8x128xf32>
    %c0_22 = arith.constant 0 : index
    %c0_23 = arith.constant 0 : index
    %35 = vector.load %arg9[%c0_22, %c0_23] : memref<1x128xf32, #tpu.memory_space<vmem>>, vector<1x128xf32>
    %36 = vector.broadcast %35 : vector<1x128xf32> to vector<8x128xf32>
    %37 = arith.addf %34, %36 : vector<8x128xf32>
    %c0_24 = arith.constant 0 : index
    %c0_25 = arith.constant 0 : index
    %38 = vector.load %arg11[%c0_24, %c0_25] : memref<8x128xf32, #tpu.memory_space<vmem>>, vector<8x128xf32>
    tpu.vector_store %arg11[%c0_24, %c0_25], %37 {strides = array<i32>} : memref<8x128xf32, #tpu.memory_space<vmem>>, vector<8x128xf32>,
    %c0_26 = arith.constant 0 : index
    %c0_27 = arith.constant 0 : index
    %39 = vector.load %arg10[%c0_26, %c0_27] : memref<8x128xf32, #tpu.memory_space<vmem>>, vector<8x128xf32>
    %40 = arith.subf %37, %39 : vector<8x128xf32>
    %41 = tpu.iota {dimensions = array<i32: 1>} : vector<8x128xi32>
    %42 = tpu.iota {dimensions = array<i32: 0>} : vector<8x128xi32>
    %c8_i32 = arith.constant 8 : i32
    %43 = arith.muli %arg0, %c8_i32 : i32
    %44 = vector.broadcast %43 : i32 to vector<8x128xi32>
    %45 = arith.addi %42, %44 : vector<8x128xi32>
    %c24_i32 = arith.constant 24 : i32
    %46 = vector.broadcast %c24_i32 : i32 to vector<8x128xi32>
    %47 = arith.cmpi slt, %41, %46 : vector<8x128xi32>
    %c26_i32 = arith.constant 26 : i32
    %48 = vector.broadcast %c26_i32 : i32 to vector<8x128xi32>
    %49 = arith.cmpi slt, %41, %48 : vector<8x128xi32>
    %cst_28 = arith.constant 5.000000e-01 : f32
    %cst_29 = arith.constant 0.000000e+00 : f32
    %50 = vector.broadcast %cst_28 : f32 to vector<8x128xf32>
    %51 = vector.broadcast %cst_29 : f32 to vector<8x128xf32>
    %52 = arith.select %49, %50, %51 : vector<8x128xi1>, vector<8x128xf32>
    %cst_30 = arith.constant 0.020833334 : f32
    %53 = vector.broadcast %cst_30 : f32 to vector<8x128xf32>
    %54 = arith.select %47, %53, %52 : vector<8x128xi1>, vector<8x128xf32>
    %c24_i32_31 = arith.constant 24 : i32
    %55 = vector.broadcast %c24_i32_31 : i32 to vector<8x128xi32>
    %56 = arith.cmpi slt, %41, %55 : vector<8x128xi32>
    %57 = math.absf %40 : vector<8x128xf32>
    %58 = arith.mulf %40, %40 : vector<8x128xf32>
    %59 = arith.select %56, %57, %58 : vector<8x128xi1>, vector<8x128xf32>
    %c2_i32 = arith.constant 2 : i32
    %60 = vector.broadcast %c2_i32 : i32 to vector<8x128xi32>
    %61 = arith.cmpi slt, %45, %60 : vector<8x128xi32>
    %62 = arith.mulf %54, %59 : vector<8x128xf32>
    %cst_32 = arith.constant 0.000000e+00 : f32
    %63 = vector.broadcast %cst_32 : f32 to vector<8x128xf32>
    %64 = arith.select %61, %62, %63 : vector<8x128xi1>, vector<8x128xf32>
    %65 = vector.shape_cast %64 : vector<8x128xf32> to vector<1x8x128xf32>
    %cst_33 = arith.constant dense<0.000000e+00> : vector<1xf32>
    %66 = vector.multi_reduction <add>, %65, %cst_33 [1, 2] : vector<1x8x128xf32> to vector<1xf32>
    %67 = vector.shape_cast %66 : vector<1xf32> to vector<1x1x1xf32>
    %68 = vector.extract %67[0, 0, 0] : f32 from vector<1x1x1xf32>
    %69 = vector.broadcast %68 : f32 to vector<1x128xf32>
    %c0_34 = arith.constant 0 : index
    %c0_35 = arith.constant 0 : index
    %70 = vector.load %arg12[%c0_34, %c0_35] : memref<1x128xf32, #tpu.memory_space<vmem>>, vector<1x128xf32>
    tpu.vector_store %arg12[%c0_34, %c0_35], %69 {strides = array<i32>} : memref<1x128xf32, #tpu.memory_space<vmem>>, vector<1x128xf32>,
    return
  }
  func.func @transform_0(%arg0: i32) -> (i32, i32) {
    %c0_i32 = arith.constant 0 : i32
    %c0_i32_0 = arith.constant 0 : i32
    return %arg0, %c0_i32 : i32, i32
  }
  func.func @transform_1(%arg0: i32) -> (i32, i32) {
    %c0_i32 = arith.constant 0 : i32
    %c0_i32_0 = arith.constant 0 : i32
    return %arg0, %c0_i32 : i32, i32
  }
  func.func @transform_2(%arg0: i32) -> (i32, i32) {
    %c0_i32 = arith.constant 0 : i32
    %c0_i32_0 = arith.constant 0 : i32
    %c0_i32_1 = arith.constant 0 : i32
    return %c0_i32, %c0_i32_0 : i32, i32
  }
  func.func @transform_3(%arg0: i32) -> (i32, i32) {
    %c0_i32 = arith.constant 0 : i32
    %c0_i32_0 = arith.constant 0 : i32
    %c0_i32_1 = arith.constant 0 : i32
    return %c0_i32, %c0_i32_0 : i32, i32
  }
  func.func @transform_4(%arg0: i32) -> (i32, i32) {
    %c0_i32 = arith.constant 0 : i32
    %c0_i32_0 = arith.constant 0 : i32
    %c0_i32_1 = arith.constant 0 : i32
    return %c0_i32, %c0_i32_0 : i32, i32
  }
  func.func @transform_5(%arg0: i32) -> (i32, i32) {
    %c0_i32 = arith.constant 0 : i32
    %c0_i32_0 = arith.constant 0 : i32
    %c0_i32_1 = arith.constant 0 : i32
    return %c0_i32, %c0_i32_0 : i32, i32
  }
  func.func @transform_6(%arg0: i32) -> (i32, i32) {
    %c0_i32 = arith.constant 0 : i32
    %c0_i32_0 = arith.constant 0 : i32
    %c0_i32_1 = arith.constant 0 : i32
    return %c0_i32, %c0_i32_0 : i32, i32
  }
  func.func @transform_7(%arg0: i32) -> (i32, i32) {
    %c0_i32 = arith.constant 0 : i32
    %c0_i32_0 = arith.constant 0 : i32
    %c0_i32_1 = arith.constant 0 : i32
    return %c0_i32, %c0_i32_0 : i32, i32
  }
  func.func @transform_8(%arg0: i32) -> (i32, i32) {
    %c0_i32 = arith.constant 0 : i32
    %c0_i32_0 = arith.constant 0 : i32
    %c0_i32_1 = arith.constant 0 : i32
    return %c0_i32, %c0_i32_0 : i32, i32
  }
  func.func @transform_9(%arg0: i32) -> (i32, i32) {
    %c0_i32 = arith.constant 0 : i32
    %c0_i32_0 = arith.constant 0 : i32
    return %arg0, %c0_i32 : i32, i32
  }
  func.func @transform_10(%arg0: i32) -> (i32, i32) {
    %c0_i32 = arith.constant 0 : i32
    %c0_i32_0 = arith.constant 0 : i32
    return %arg0, %c0_i32 : i32, i32
  }
  func.func @transform_11(%arg0: i32) -> (i32, i32) {
    %c0_i32 = arith.constant 0 : i32
    %c0_i32_0 = arith.constant 0 : i32
    return %arg0, %c0_i32 : i32, i32
  }
}

</mosaic_0001>

<llo_original>
// kernel: tpu_custom_call.1
$region0: #{tpu_custom_call.1}
  #allocation0 [shape = 'u32[]', space=smem, size = 0x4, offset = 0x4, fixed_abs, tag = 'smem constant byte address 0x4 - core index']
  #allocation1 [shape = 'u32[144,128]{1,0:T(1,128)}', space=vmem, size = 0x12000, scoped, tag = 'internal scratch']
  %s0 = inlined_call_operand.vmem [shape: f32[8,3072], index: 0, kind: input, shape index: {}]
  %s1 = inlined_call_operand.vmem [shape: f32[8,128], index: 1, kind: input, shape index: {}]
  %s2 = inlined_call_operand.vmem [shape: bf16[3072,32], index: 2, kind: input, shape index: {}]
  %s3 = inlined_call_operand.vmem [shape: bf16[128,32], index: 3, kind: input, shape index: {}]
  %s4 = inlined_call_operand.vmem [shape: f32[1,32], index: 4, kind: input, shape index: {}]
  %s5 = inlined_call_operand.vmem [shape: bf16[32,256], index: 5, kind: input, shape index: {}]
  %s6 = inlined_call_operand.vmem [shape: f32[1,256], index: 6, kind: input, shape index: {}]
  %s7 = inlined_call_operand.vmem [shape: bf16[256,128], index: 7, kind: input, shape index: {}]
  %s8 = inlined_call_operand.vmem [shape: f32[1,128], index: 8, kind: input, shape index: {}]
  %s9 = inlined_call_operand.vmem [shape: f32[8,128], index: 9, kind: input, shape index: {}]
  %s10 = inlined_call_operand.hbm [shape: f32[8,128], index: 10, kind: output, shape index: {0}]
  %s11 = inlined_call_operand.hbm [shape: f32[1,128], index: 11, kind: output, shape index: {1}]
  %12 = xla_tuple %s10, %s11
  %s13 = sld [smem:[#allocation0]]
  $region58: #{tpu_custom_call.1} parent=0
    _
  %s15 = ssub.s32 1, %s13
  %s16 = scalar_select 0, %s15, %s13
  $region1: #{tpu_custom_call.1} parent=0
    #allocation2 [shape = 'u8[4096]{0}', space=vmem, size = 0x1000, scoped, tag = 'output window, operand 0, single buffered']
    #allocation3 [shape = 's32[1]{0}', space=sflag, size = 0x4, scoped, tag = 'scoped memory for tpu_custom_call.1']
    #allocation4 [shape = 'u8[512]{0}', space=vmem, size = 0x400, scoped, tag = 'output window, operand 1, single buffered']
    #allocation5 [shape = 's32[1]{0}', space=sflag, size = 0x4, scoped, tag = 'scoped memory for tpu_custom_call.1']
    %17 = vsyncpa [#allocation3], 0
    %18 = vsyncpa [#allocation5], 0
    // Predicated region
    $region2: #{tpu_custom_call.1} parent=1 // pred_check
      _
    $region3: #{tpu_custom_call.1} parent=1 // pred_check_branch
      %20 = sbr.rel (0) target = $region5
    $region4: #{tpu_custom_call.1} parent=1 // pred_region
      _
    $region5: #{tpu_custom_call.1} parent=1 // pred_fallthru
      _
    // Predicated region
    $region6: #{tpu_custom_call.1} parent=1 // pred_check
      _
    $region7: #{tpu_custom_call.1} parent=1 // pred_check_branch
      %22 = sbr.rel (0) target = $region9
    $region8: #{tpu_custom_call.1} parent=1 // pred_region
      _
    $region9: #{tpu_custom_call.1} parent=1 // pred_fallthru
      _
    // Predicated region
    $region10: #{tpu_custom_call.1} parent=1 // pred_check
      _
    $region11: #{tpu_custom_call.1} parent=1 // pred_check_branch
      %24 = sbr.rel (0) target = $region13
    $region12: #{tpu_custom_call.1} parent=1 // pred_region
      _
    $region13: #{tpu_custom_call.1} parent=1 // pred_fallthru
      _
    // Predicated region
    $region14: #{tpu_custom_call.1} parent=1 // pred_check
      _
    $region15: #{tpu_custom_call.1} parent=1 // pred_check_branch
      %26 = sbr.rel (0) target = $region17
    $region16: #{tpu_custom_call.1} parent=1 // pred_region
      _
    $region17: #{tpu_custom_call.1} parent=1 // pred_fallthru
      _
    // Predicated region
    $region18: #{tpu_custom_call.1} parent=1 // pred_check
      _
    $region19: #{tpu_custom_call.1} parent=1 // pred_check_branch
      %28 = sbr.rel (0) target = $region21
    $region20: #{tpu_custom_call.1} parent=1 // pred_region
      _
    $region21: #{tpu_custom_call.1} parent=1 // pred_fallthru
      _
    // Predicated region
    $region22: #{tpu_custom_call.1} parent=1 // pred_check
      _
    $region23: #{tpu_custom_call.1} parent=1 // pred_check_branch
      %30 = sbr.rel (0) target = $region25
    $region24: #{tpu_custom_call.1} parent=1 // pred_region
      _
    $region25: #{tpu_custom_call.1} parent=1 // pred_fallthru
      _
    // Predicated region
    $region26: #{tpu_custom_call.1} parent=1 // pred_check
      _
    $region27: #{tpu_custom_call.1} parent=1 // pred_check_branch
      %32 = sbr.rel (0) target = $region29
    $region28: #{tpu_custom_call.1} parent=1 // pred_region
      _
    $region29: #{tpu_custom_call.1} parent=1 // pred_fallthru
      _
    // Predicated region
    $region30: #{tpu_custom_call.1} parent=1 // pred_check
      _
    $region31: #{tpu_custom_call.1} parent=1 // pred_check_branch
      %34 = sbr.rel (0) target = $region33
    $region32: #{tpu_custom_call.1} parent=1 // pred_region
      _
    $region33: #{tpu_custom_call.1} parent=1 // pred_fallthru
      _
    // Predicated region
    $region34: #{tpu_custom_call.1} parent=1 // pred_check
      _
    $region35: #{tpu_custom_call.1} parent=1 // pred_check_branch
      %36 = sbr.rel (0) target = $region37
    $region36: #{tpu_custom_call.1} parent=1 // pred_region
      _
    $region37: #{tpu_custom_call.1} parent=1 // pred_fallthru
      _
    // Predicated region
    $region38: #{tpu_custom_call.1} parent=1 // pred_check
      _
    $region39: #{tpu_custom_call.1} parent=1 // pred_check_branch
      %38 = sbr.rel (0) target = $region41
    $region40: #{tpu_custom_call.1} parent=1 // pred_region
      _
    $region41: #{tpu_custom_call.1} parent=1 // pred_fallthru
      _
    %v40 = vld [vmem:[%s0] sm:$0xff]
    %v41 = vld [vmem:[%s0 + $0x8] sm:$0xff]
    %v42 = vld [vmem:[%s0 + $0x10] sm:$0xff]
    %v43 = vld [vmem:[%s0 + $0x18] sm:$0xff]
    %v44 = vld [vmem:[%s0 + $0x20] sm:$0xff]
    %v45 = vld [vmem:[%s0 + $0x28] sm:$0xff]
    %v46 = vld [vmem:[%s0 + $0x30] sm:$0xff]
    %v47 = vld [vmem:[%s0 + $0x38] sm:$0xff]
    %v48 = vld [vmem:[%s0 + $0x40] sm:$0xff]
    %v49 = vld [vmem:[%s0 + $0x48] sm:$0xff]
    %v50 = vld [vmem:[%s0 + $0x50] sm:$0xff]
    %v51 = vld [vmem:[%s0 + $0x58] sm:$0xff]
    %v52 = vld [vmem:[%s0 + $0x60] sm:$0xff]
    %v53 = vld [vmem:[%s0 + $0x68] sm:$0xff]
    %v54 = vld [vmem:[%s0 + $0x70] sm:$0xff]
    %v55 = vld [vmem:[%s0 + $0x78] sm:$0xff]
    %v56 = vld [vmem:[%s0 + $0x80] sm:$0xff]
    %v57 = vld [vmem:[%s0 + $0x88] sm:$0xff]
    %v58 = vld [vmem:[%s0 + $0x90] sm:$0xff]
    %v59 = vld [vmem:[%s0 + $0x98] sm:$0xff]
    %v60 = vld [vmem:[%s0 + $0xa0] sm:$0xff]
    %v61 = vld [vmem:[%s0 + $0xa8] sm:$0xff]
    %v62 = vld [vmem:[%s0 + $0xb0] sm:$0xff]
    %v63 = vld [vmem:[%s0 + $0xb8] sm:$0xff]
    %v64 = vpack.c.bf16 %v40, %v40
    %v65 = vpack.c.bf16 %v41, %v41
    %v66 = vpack.c.bf16 %v42, %v42
    %v67 = vpack.c.bf16 %v43, %v43
    %v68 = vpack.c.bf16 %v44, %v44
    %v69 = vpack.c.bf16 %v45, %v45
    %v70 = vpack.c.bf16 %v46, %v46
    %v71 = vpack.c.bf16 %v47, %v47
    %v72 = vpack.c.bf16 %v48, %v48
    %v73 = vpack.c.bf16 %v49, %v49
    %v74 = vpack.c.bf16 %v50, %v50
    %v75 = vpack.c.bf16 %v51, %v51
    %v76 = vpack.c.bf16 %v52, %v52
    %v77 = vpack.c.bf16 %v53, %v53
    %v78 = vpack.c.bf16 %v54, %v54
    %v79 = vpack.c.bf16 %v55, %v55
    %v80 = vpack.c.bf16 %v56, %v56
    %v81 = vpack.c.bf16 %v57, %v57
    %v82 = vpack.c.bf16 %v58, %v58
    %v83 = vpack.c.bf16 %v59, %v59
    %v84 = vpack.c.bf16 %v60, %v60
    %v85 = vpack.c.bf16 %v61, %v61
    %v86 = vpack.c.bf16 %v62, %v62
    %v87 = vpack.c.bf16 %v63, %v63
    %v88 = vld [vmem:[%s2] sm:$0xf]
    %v89 = vld [vmem:[%s2 + $0x4] sm:$0xf]
    %v90 = vld [vmem:[%s2 + $0x8] sm:$0xf]
    %v91 = vld [vmem:[%s2 + $0xc] sm:$0xf]
    %v92 = vld [vmem:[%s2 + $0x10] sm:$0xf]
    %v93 = vld [vmem:[%s2 + $0x14] sm:$0xf]
    %v94 = vld [vmem:[%s2 + $0x18] sm:$0xf]
    %v95 = vld [vmem:[%s2 + $0x1c] sm:$0xf]
    %v96 = vld [vmem:[%s2 + $0x20] sm:$0xf]
    %v97 = vld [vmem:[%s2 + $0x24] sm:$0xf]
    %v98 = vld [vmem:[%s2 + $0x28] sm:$0xf]
    %v99 = vld [vmem:[%s2 + $0x2c] sm:$0xf]
    %v100 = vld [vmem:[%s2 + $0x30] sm:$0xf]
    %v101 = vld [vmem:[%s2 + $0x34] sm:$0xf]
    %v102 = vld [vmem:[%s2 + $0x38] sm:$0xf]
    %v103 = vld [vmem:[%s2 + $0x3c] sm:$0xf]
    %v104 = vld [vmem:[%s2 + $0x40] sm:$0xf]
    %v105 = vld [vmem:[%s2 + $0x44] sm:$0xf]
    %v106 = vld [vmem:[%s2 + $0x48] sm:$0xf]
    %v107 = vld [vmem:[%s2 + $0x4c] sm:$0xf]
    %v108 = vld [vmem:[%s2 + $0x50] sm:$0xf]
    %v109 = vld [vmem:[%s2 + $0x54] sm:$0xf]
    %v110 = vld [vmem:[%s2 + $0x58] sm:$0xf]
    %v111 = vld [vmem:[%s2 + $0x5c] sm:$0xf]
    %v112 = vld [vmem:[%s2 + $0x60] sm:$0xf]
    %v113 = vld [vmem:[%s2 + $0x64] sm:$0xf]
    %v114 = vld [vmem:[%s2 + $0x68] sm:$0xf]
    %v115 = vld [vmem:[%s2 + $0x6c] sm:$0xf]
    %v116 = vld [vmem:[%s2 + $0x70] sm:$0xf]
    %v117 = vld [vmem:[%s2 + $0x74] sm:$0xf]
    %v118 = vld [vmem:[%s2 + $0x78] sm:$0xf]
    %v119 = vld [vmem:[%s2 + $0x7c] sm:$0xf]
    %v120 = vld [vmem:[%s2 + $0x80] sm:$0xf]
    %v121 = vld [vmem:[%s2 + $0x84] sm:$0xf]
    %v122 = vld [vmem:[%s2 + $0x88] sm:$0xf]
    %v123 = vld [vmem:[%s2 + $0x8c] sm:$0xf]
    %v124 = vld [vmem:[%s2 + $0x90] sm:$0xf]
    %v125 = vld [vmem:[%s2 + $0x94] sm:$0xf]
    %v126 = vld [vmem:[%s2 + $0x98] sm:$0xf]
    %v127 = vld [vmem:[%s2 + $0x9c] sm:$0xf]
    %v128 = vld [vmem:[%s2 + $0xa0] sm:$0xf]
    %v129 = vld [vmem:[%s2 + $0xa4] sm:$0xf]
    %v130 = vld [vmem:[%s2 + $0xa8] sm:$0xf]
    %v131 = vld [vmem:[%s2 + $0xac] sm:$0xf]
    %v132 = vld [vmem:[%s2 + $0xb0] sm:$0xf]
    %v133 = vld [vmem:[%s2 + $0xb4] sm:$0xf]
    %v134 = vld [vmem:[%s2 + $0xb8] sm:$0xf]
    %v135 = vld [vmem:[%s2 + $0xbc] sm:$0xf]
    %v136 = vld [vmem:[%s2 + $0xc0] sm:$0xf]
    %v137 = vld [vmem:[%s2 + $0xc4] sm:$0xf]
    %v138 = vld [vmem:[%s2 + $0xc8] sm:$0xf]
    %v139 = vld [vmem:[%s2 + $0xcc] sm:$0xf]
    %v140 = vld [vmem:[%s2 + $0xd0] sm:$0xf]
    %v141 = vld [vmem:[%s2 + $0xd4] sm:$0xf]
    %v142 = vld [vmem:[%s2 + $0xd8] sm:$0xf]
    %v143 = vld [vmem:[%s2 + $0xdc] sm:$0xf]
    %v144 = vld [vmem:[%s2 + $0xe0] sm:$0xf]
    %v145 = vld [vmem:[%s2 + $0xe4] sm:$0xf]
    %v146 = vld [vmem:[%s2 + $0xe8] sm:$0xf]
    %v147 = vld [vmem:[%s2 + $0xec] sm:$0xf]
    %v148 = vld [vmem:[%s2 + $0xf0] sm:$0xf]
    %v149 = vld [vmem:[%s2 + $0xf4] sm:$0xf]
    %v150 = vld [vmem:[%s2 + $0xf8] sm:$0xf]
    %v151 = vld [vmem:[%s2 + $0xfc] sm:$0xf]
    %v152 = vld [vmem:[%s2 + $0x100] sm:$0xf]
    %v153 = vld [vmem:[%s2 + $0x104] sm:$0xf]
    %v154 = vld [vmem:[%s2 + $0x108] sm:$0xf]
    %v155 = vld [vmem:[%s2 + $0x10c] sm:$0xf]
    %v156 = vld [vmem:[%s2 + $0x110] sm:$0xf]
    %v157 = vld [vmem:[%s2 + $0x114] sm:$0xf]
    %v158 = vld [vmem:[%s2 + $0x118] sm:$0xf]
    %v159 = vld [vmem:[%s2 + $0x11c] sm:$0xf]
    %v160 = vld [vmem:[%s2 + $0x120] sm:$0xf]
    %v161 = vld [vmem:[%s2 + $0x124] sm:$0xf]
    %v162 = vld [vmem:[%s2 + $0x128] sm:$0xf]
    %v163 = vld [vmem:[%s2 + $0x12c] sm:$0xf]
    %v164 = vld [vmem:[%s2 + $0x130] sm:$0xf]
    %v165 = vld [vmem:[%s2 + $0x134] sm:$0xf]
    %v166 = vld [vmem:[%s2 + $0x138] sm:$0xf]
    %v167 = vld [vmem:[%s2 + $0x13c] sm:$0xf]
    %v168 = vld [vmem:[%s2 + $0x140] sm:$0xf]
    %v169 = vld [vmem:[%s2 + $0x144] sm:$0xf]
    %v170 = vld [vmem:[%s2 + $0x148] sm:$0xf]
    %v171 = vld [vmem:[%s2 + $0x14c] sm:$0xf]
    %v172 = vld [vmem:[%s2 + $0x150] sm:$0xf]
    %v173 = vld [vmem:[%s2 + $0x154] sm:$0xf]
    %v174 = vld [vmem:[%s2 + $0x158] sm:$0xf]
    %v175 = vld [vmem:[%s2 + $0x15c] sm:$0xf]
    %v176 = vld [vmem:[%s2 + $0x160] sm:$0xf]
    %v177 = vld [vmem:[%s2 + $0x164] sm:$0xf]
    %v178 = vld [vmem:[%s2 + $0x168] sm:$0xf]
    %v179 = vld [vmem:[%s2 + $0x16c] sm:$0xf]
    %v180 = vld [vmem:[%s2 + $0x170] sm:$0xf]
    %v181 = vld [vmem:[%s2 + $0x174] sm:$0xf]
    %v182 = vld [vmem:[%s2 + $0x178] sm:$0xf]
    %v183 = vld [vmem:[%s2 + $0x17c] sm:$0xf]
    %v184 = vld [vmem:[%s2 + $0x180] sm:$0xf]
    %v185 = vld [vmem:[%s2 + $0x184] sm:$0xf]
    %v186 = vld [vmem:[%s2 + $0x188] sm:$0xf]
    %v187 = vld [vmem:[%s2 + $0x18c] sm:$0xf]
    %v188 = vld [vmem:[%s2 + $0x190] sm:$0xf]
    %v189 = vld [vmem:[%s2 + $0x194] sm:$0xf]
    %v190 = vld [vmem:[%s2 + $0x198] sm:$0xf]
    %v191 = vld [vmem:[%s2 + $0x19c] sm:$0xf]
    %v192 = vld [vmem:[%s2 + $0x1a0] sm:$0xf]
    %v193 = vld [vmem:[%s2 + $0x1a4] sm:$0xf]
    %v194 = vld [vmem:[%s2 + $0x1a8] sm:$0xf]
    %v195 = vld [vmem:[%s2 + $0x1ac] sm:$0xf]
    %v196 = vld [vmem:[%s2 + $0x1b0] sm:$0xf]
    %v197 = vld [vmem:[%s2 + $0x1b4] sm:$0xf]
    %v198 = vld [vmem:[%s2 + $0x1b8] sm:$0xf]
    %v199 = vld [vmem:[%s2 + $0x1bc] sm:$0xf]
    %v200 = vld [vmem:[%s2 + $0x1c0] sm:$0xf]
    %v201 = vld [vmem:[%s2 + $0x1c4] sm:$0xf]
    %v202 = vld [vmem:[%s2 + $0x1c8] sm:$0xf]
    %v203 = vld [vmem:[%s2 + $0x1cc] sm:$0xf]
    %v204 = vld [vmem:[%s2 + $0x1d0] sm:$0xf]
    %v205 = vld [vmem:[%s2 + $0x1d4] sm:$0xf]
    %v206 = vld [vmem:[%s2 + $0x1d8] sm:$0xf]
    %v207 = vld [vmem:[%s2 + $0x1dc] sm:$0xf]
    %v208 = vld [vmem:[%s2 + $0x1e0] sm:$0xf]
    %v209 = vld [vmem:[%s2 + $0x1e4] sm:$0xf]
    %v210 = vld [vmem:[%s2 + $0x1e8] sm:$0xf]
    %v211 = vld [vmem:[%s2 + $0x1ec] sm:$0xf]
    %v212 = vld [vmem:[%s2 + $0x1f0] sm:$0xf]
    %v213 = vld [vmem:[%s2 + $0x1f4] sm:$0xf]
    %v214 = vld [vmem:[%s2 + $0x1f8] sm:$0xf]
    %v215 = vld [vmem:[%s2 + $0x1fc] sm:$0xf]
    %v216 = vld [vmem:[%s2 + $0x200] sm:$0xf]
    %v217 = vld [vmem:[%s2 + $0x204] sm:$0xf]
    %v218 = vld [vmem:[%s2 + $0x208] sm:$0xf]
    %v219 = vld [vmem:[%s2 + $0x20c] sm:$0xf]
    %v220 = vld [vmem:[%s2 + $0x210] sm:$0xf]
    %v221 = vld [vmem:[%s2 + $0x214] sm:$0xf]
    %v222 = vld [vmem:[%s2 + $0x218] sm:$0xf]
    %v223 = vld [vmem:[%s2 + $0x21c] sm:$0xf]
    %v224 = vld [vmem:[%s2 + $0x220] sm:$0xf]
    %v225 = vld [vmem:[%s2 + $0x224] sm:$0xf]
    %v226 = vld [vmem:[%s2 + $0x228] sm:$0xf]
    %v227 = vld [vmem:[%s2 + $0x22c] sm:$0xf]
    %v228 = vld [vmem:[%s2 + $0x230] sm:$0xf]
    %v229 = vld [vmem:[%s2 + $0x234] sm:$0xf]
    %v230 = vld [vmem:[%s2 + $0x238] sm:$0xf]
    %v231 = vld [vmem:[%s2 + $0x23c] sm:$0xf]
    %v232 = vld [vmem:[%s2 + $0x240] sm:$0xf]
    %v233 = vld [vmem:[%s2 + $0x244] sm:$0xf]
    %v234 = vld [vmem:[%s2 + $0x248] sm:$0xf]
    %v235 = vld [vmem:[%s2 + $0x24c] sm:$0xf]
    %v236 = vld [vmem:[%s2 + $0x250] sm:$0xf]
    %v237 = vld [vmem:[%s2 + $0x254] sm:$0xf]
    %v238 = vld [vmem:[%s2 + $0x258] sm:$0xf]
    %v239 = vld [vmem:[%s2 + $0x25c] sm:$0xf]
    %v240 = vld [vmem:[%s2 + $0x260] sm:$0xf]
    %v241 = vld [vmem:[%s2 + $0x264] sm:$0xf]
    %v242 = vld [vmem:[%s2 + $0x268] sm:$0xf]
    %v243 = vld [vmem:[%s2 + $0x26c] sm:$0xf]
    %v244 = vld [vmem:[%s2 + $0x270] sm:$0xf]
    %v245 = vld [vmem:[%s2 + $0x274] sm:$0xf]
    %v246 = vld [vmem:[%s2 + $0x278] sm:$0xf]
    %v247 = vld [vmem:[%s2 + $0x27c] sm:$0xf]
    %v248 = vld [vmem:[%s2 + $0x280] sm:$0xf]
    %v249 = vld [vmem:[%s2 + $0x284] sm:$0xf]
    %v250 = vld [vmem:[%s2 + $0x288] sm:$0xf]
    %v251 = vld [vmem:[%s2 + $0x28c] sm:$0xf]
    %v252 = vld [vmem:[%s2 + $0x290] sm:$0xf]
    %v253 = vld [vmem:[%s2 + $0x294] sm:$0xf]
    %v254 = vld [vmem:[%s2 + $0x298] sm:$0xf]
    %v255 = vld [vmem:[%s2 + $0x29c] sm:$0xf]
    %v256 = vld [vmem:[%s2 + $0x2a0] sm:$0xf]
    %v257 = vld [vmem:[%s2 + $0x2a4] sm:$0xf]
    %v258 = vld [vmem:[%s2 + $0x2a8] sm:$0xf]
    %v259 = vld [vmem:[%s2 + $0x2ac] sm:$0xf]
    %v260 = vld [vmem:[%s2 + $0x2b0] sm:$0xf]
    %v261 = vld [vmem:[%s2 + $0x2b4] sm:$0xf]
    %v262 = vld [vmem:[%s2 + $0x2b8] sm:$0xf]
    %v263 = vld [vmem:[%s2 + $0x2bc] sm:$0xf]
    %v264 = vld [vmem:[%s2 + $0x2c0] sm:$0xf]
    %v265 = vld [vmem:[%s2 + $0x2c4] sm:$0xf]
    %v266 = vld [vmem:[%s2 + $0x2c8] sm:$0xf]
    %v267 = vld [vmem:[%s2 + $0x2cc] sm:$0xf]
    %v268 = vld [vmem:[%s2 + $0x2d0] sm:$0xf]
    %v269 = vld [vmem:[%s2 + $0x2d4] sm:$0xf]
    %v270 = vld [vmem:[%s2 + $0x2d8] sm:$0xf]
    %v271 = vld [vmem:[%s2 + $0x2dc] sm:$0xf]
    %v272 = vld [vmem:[%s2 + $0x2e0] sm:$0xf]
    %v273 = vld [vmem:[%s2 + $0x2e4] sm:$0xf]
    %v274 = vld [vmem:[%s2 + $0x2e8] sm:$0xf]
    %v275 = vld [vmem:[%s2 + $0x2ec] sm:$0xf]
    %v276 = vld [vmem:[%s2 + $0x2f0] sm:$0xf]
    %v277 = vld [vmem:[%s2 + $0x2f4] sm:$0xf]
    %v278 = vld [vmem:[%s2 + $0x2f8] sm:$0xf]
    %v279 = vld [vmem:[%s2 + $0x2fc] sm:$0xf]
    %v280 = vld [vmem:[%s2 + $0x300] sm:$0xf]
    %v281 = vld [vmem:[%s2 + $0x304] sm:$0xf]
    %v282 = vld [vmem:[%s2 + $0x308] sm:$0xf]
    %v283 = vld [vmem:[%s2 + $0x30c] sm:$0xf]
    %v284 = vld [vmem:[%s2 + $0x310] sm:$0xf]
    %v285 = vld [vmem:[%s2 + $0x314] sm:$0xf]
    %v286 = vld [vmem:[%s2 + $0x318] sm:$0xf]
    %v287 = vld [vmem:[%s2 + $0x31c] sm:$0xf]
    %v288 = vld [vmem:[%s2 + $0x320] sm:$0xf]
    %v289 = vld [vmem:[%s2 + $0x324] sm:$0xf]
    %v290 = vld [vmem:[%s2 + $0x328] sm:$0xf]
    %v291 = vld [vmem:[%s2 + $0x32c] sm:$0xf]
    %v292 = vld [vmem:[%s2 + $0x330] sm:$0xf]
    %v293 = vld [vmem:[%s2 + $0x334] sm:$0xf]
    %v294 = vld [vmem:[%s2 + $0x338] sm:$0xf]
    %v295 = vld [vmem:[%s2 + $0x33c] sm:$0xf]
    %v296 = vld [vmem:[%s2 + $0x340] sm:$0xf]
    %v297 = vld [vmem:[%s2 + $0x344] sm:$0xf]
    %v298 = vld [vmem:[%s2 + $0x348] sm:$0xf]
    %v299 = vld [vmem:[%s2 + $0x34c] sm:$0xf]
    %v300 = vld [vmem:[%s2 + $0x350] sm:$0xf]
    %v301 = vld [vmem:[%s2 + $0x354] sm:$0xf]
    %v302 = vld [vmem:[%s2 + $0x358] sm:$0xf]
    %v303 = vld [vmem:[%s2 + $0x35c] sm:$0xf]
    %v304 = vld [vmem:[%s2 + $0x360] sm:$0xf]
    %v305 = vld [vmem:[%s2 + $0x364] sm:$0xf]
    %v306 = vld [vmem:[%s2 + $0x368] sm:$0xf]
    %v307 = vld [vmem:[%s2 + $0x36c] sm:$0xf]
    %v308 = vld [vmem:[%s2 + $0x370] sm:$0xf]
    %v309 = vld [vmem:[%s2 + $0x374] sm:$0xf]
    %v310 = vld [vmem:[%s2 + $0x378] sm:$0xf]
    %v311 = vld [vmem:[%s2 + $0x37c] sm:$0xf]
    %v312 = vld [vmem:[%s2 + $0x380] sm:$0xf]
    %v313 = vld [vmem:[%s2 + $0x384] sm:$0xf]
    %v314 = vld [vmem:[%s2 + $0x388] sm:$0xf]
    %v315 = vld [vmem:[%s2 + $0x38c] sm:$0xf]
    %v316 = vld [vmem:[%s2 + $0x390] sm:$0xf]
    %v317 = vld [vmem:[%s2 + $0x394] sm:$0xf]
    %v318 = vld [vmem:[%s2 + $0x398] sm:$0xf]
    %v319 = vld [vmem:[%s2 + $0x39c] sm:$0xf]
    %v320 = vld [vmem:[%s2 + $0x3a0] sm:$0xf]
    %v321 = vld [vmem:[%s2 + $0x3a4] sm:$0xf]
    %v322 = vld [vmem:[%s2 + $0x3a8] sm:$0xf]
    %v323 = vld [vmem:[%s2 + $0x3ac] sm:$0xf]
    %v324 = vld [vmem:[%s2 + $0x3b0] sm:$0xf]
    %v325 = vld [vmem:[%s2 + $0x3b4] sm:$0xf]
    %v326 = vld [vmem:[%s2 + $0x3b8] sm:$0xf]
    %v327 = vld [vmem:[%s2 + $0x3bc] sm:$0xf]
    %v328 = vld [vmem:[%s2 + $0x3c0] sm:$0xf]
    %v329 = vld [vmem:[%s2 + $0x3c4] sm:$0xf]
    %v330 = vld [vmem:[%s2 + $0x3c8] sm:$0xf]
    %v331 = vld [vmem:[%s2 + $0x3cc] sm:$0xf]
    %v332 = vld [vmem:[%s2 + $0x3d0] sm:$0xf]
    %v333 = vld [vmem:[%s2 + $0x3d4] sm:$0xf]
    %v334 = vld [vmem:[%s2 + $0x3d8] sm:$0xf]
    %v335 = vld [vmem:[%s2 + $0x3dc] sm:$0xf]
    %v336 = vld [vmem:[%s2 + $0x3e0] sm:$0xf]
    %v337 = vld [vmem:[%s2 + $0x3e4] sm:$0xf]
    %v338 = vld [vmem:[%s2 + $0x3e8] sm:$0xf]
    %v339 = vld [vmem:[%s2 + $0x3ec] sm:$0xf]
    %v340 = vld [vmem:[%s2 + $0x3f0] sm:$0xf]
    %v341 = vld [vmem:[%s2 + $0x3f4] sm:$0xf]
    %v342 = vld [vmem:[%s2 + $0x3f8] sm:$0xf]
    %v343 = vld [vmem:[%s2 + $0x3fc] sm:$0xf]
    %v344 = vld [vmem:[%s2 + $0x400] sm:$0xf]
    %v345 = vld [vmem:[%s2 + $0x404] sm:$0xf]
    %v346 = vld [vmem:[%s2 + $0x408] sm:$0xf]
    %v347 = vld [vmem:[%s2 + $0x40c] sm:$0xf]
    %v348 = vld [vmem:[%s2 + $0x410] sm:$0xf]
    %v349 = vld [vmem:[%s2 + $0x414] sm:$0xf]
    %v350 = vld [vmem:[%s2 + $0x418] sm:$0xf]
    %v351 = vld [vmem:[%s2 + $0x41c] sm:$0xf]
    %v352 = vld [vmem:[%s2 + $0x420] sm:$0xf]
    %v353 = vld [vmem:[%s2 + $0x424] sm:$0xf]
    %v354 = vld [vmem:[%s2 + $0x428] sm:$0xf]
    %v355 = vld [vmem:[%s2 + $0x42c] sm:$0xf]
    %v356 = vld [vmem:[%s2 + $0x430] sm:$0xf]
    %v357 = vld [vmem:[%s2 + $0x434] sm:$0xf]
    %v358 = vld [vmem:[%s2 + $0x438] sm:$0xf]
    %v359 = vld [vmem:[%s2 + $0x43c] sm:$0xf]
    %v360 = vld [vmem:[%s2 + $0x440] sm:$0xf]
    %v361 = vld [vmem:[%s2 + $0x444] sm:$0xf]
    %v362 = vld [vmem:[%s2 + $0x448] sm:$0xf]
    %v363 = vld [vmem:[%s2 + $0x44c] sm:$0xf]
    %v364 = vld [vmem:[%s2 + $0x450] sm:$0xf]
    %v365 = vld [vmem:[%s2 + $0x454] sm:$0xf]
    %v366 = vld [vmem:[%s2 + $0x458] sm:$0xf]
    %v367 = vld [vmem:[%s2 + $0x45c] sm:$0xf]
    %v368 = vld [vmem:[%s2 + $0x460] sm:$0xf]
    %v369 = vld [vmem:[%s2 + $0x464] sm:$0xf]
    %v370 = vld [vmem:[%s2 + $0x468] sm:$0xf]
    %v371 = vld [vmem:[%s2 + $0x46c] sm:$0xf]
    %v372 = vld [vmem:[%s2 + $0x470] sm:$0xf]
    %v373 = vld [vmem:[%s2 + $0x474] sm:$0xf]
    %v374 = vld [vmem:[%s2 + $0x478] sm:$0xf]
    %v375 = vld [vmem:[%s2 + $0x47c] sm:$0xf]
    %v376 = vld [vmem:[%s2 + $0x480] sm:$0xf]
    %v377 = vld [vmem:[%s2 + $0x484] sm:$0xf]
    %v378 = vld [vmem:[%s2 + $0x488] sm:$0xf]
    %v379 = vld [vmem:[%s2 + $0x48c] sm:$0xf]
    %v380 = vld [vmem:[%s2 + $0x490] sm:$0xf]
    %v381 = vld [vmem:[%s2 + $0x494] sm:$0xf]
    %v382 = vld [vmem:[%s2 + $0x498] sm:$0xf]
    %v383 = vld [vmem:[%s2 + $0x49c] sm:$0xf]
    %v384 = vld [vmem:[%s2 + $0x4a0] sm:$0xf]
    %v385 = vld [vmem:[%s2 + $0x4a4] sm:$0xf]
    %v386 = vld [vmem:[%s2 + $0x4a8] sm:$0xf]
    %v387 = vld [vmem:[%s2 + $0x4ac] sm:$0xf]
    %v388 = vld [vmem:[%s2 + $0x4b0] sm:$0xf]
    %v389 = vld [vmem:[%s2 + $0x4b4] sm:$0xf]
    %v390 = vld [vmem:[%s2 + $0x4b8] sm:$0xf]
    %v391 = vld [vmem:[%s2 + $0x4bc] sm:$0xf]
    %v392 = vld [vmem:[%s2 + $0x4c0] sm:$0xf]
    %v393 = vld [vmem:[%s2 + $0x4c4] sm:$0xf]
    %v394 = vld [vmem:[%s2 + $0x4c8] sm:$0xf]
    %v395 = vld [vmem:[%s2 + $0x4cc] sm:$0xf]
    %v396 = vld [vmem:[%s2 + $0x4d0] sm:$0xf]
    %v397 = vld [vmem:[%s2 + $0x4d4] sm:$0xf]
    %v398 = vld [vmem:[%s2 + $0x4d8] sm:$0xf]
    %v399 = vld [vmem:[%s2 + $0x4dc] sm:$0xf]
    %v400 = vld [vmem:[%s2 + $0x4e0] sm:$0xf]
    %v401 = vld [vmem:[%s2 + $0x4e4] sm:$0xf]
    %v402 = vld [vmem:[%s2 + $0x4e8] sm:$0xf]
    %v403 = vld [vmem:[%s2 + $0x4ec] sm:$0xf]
    %v404 = vld [vmem:[%s2 + $0x4f0] sm:$0xf]
    %v405 = vld [vmem:[%s2 + $0x4f4] sm:$0xf]
    %v406 = vld [vmem:[%s2 + $0x4f8] sm:$0xf]
    %v407 = vld [vmem:[%s2 + $0x4fc] sm:$0xf]
    %v408 = vld [vmem:[%s2 + $0x500] sm:$0xf]
    %v409 = vld [vmem:[%s2 + $0x504] sm:$0xf]
    %v410 = vld [vmem:[%s2 + $0x508] sm:$0xf]
    %v411 = vld [vmem:[%s2 + $0x50c] sm:$0xf]
    %v412 = vld [vmem:[%s2 + $0x510] sm:$0xf]
    %v413 = vld [vmem:[%s2 + $0x514] sm:$0xf]
    %v414 = vld [vmem:[%s2 + $0x518] sm:$0xf]
    %v415 = vld [vmem:[%s2 + $0x51c] sm:$0xf]
    %v416 = vld [vmem:[%s2 + $0x520] sm:$0xf]
    %v417 = vld [vmem:[%s2 + $0x524] sm:$0xf]
    %v418 = vld [vmem:[%s2 + $0x528] sm:$0xf]
    %v419 = vld [vmem:[%s2 + $0x52c] sm:$0xf]
    %v420 = vld [vmem:[%s2 + $0x530] sm:$0xf]
    %v421 = vld [vmem:[%s2 + $0x534] sm:$0xf]
    %v422 = vld [vmem:[%s2 + $0x538] sm:$0xf]
    %v423 = vld [vmem:[%s2 + $0x53c] sm:$0xf]
    %v424 = vld [vmem:[%s2 + $0x540] sm:$0xf]
    %v425 = vld [vmem:[%s2 + $0x544] sm:$0xf]
    %v426 = vld [vmem:[%s2 + $0x548] sm:$0xf]
    %v427 = vld [vmem:[%s2 + $0x54c] sm:$0xf]
    %v428 = vld [vmem:[%s2 + $0x550] sm:$0xf]
    %v429 = vld [vmem:[%s2 + $0x554] sm:$0xf]
    %v430 = vld [vmem:[%s2 + $0x558] sm:$0xf]
    %v431 = vld [vmem:[%s2 + $0x55c] sm:$0xf]
    %v432 = vld [vmem:[%s2 + $0x560] sm:$0xf]
    %v433 = vld [vmem:[%s2 + $0x564] sm:$0xf]
    %v434 = vld [vmem:[%s2 + $0x568] sm:$0xf]
    %v435 = vld [vmem:[%s2 + $0x56c] sm:$0xf]
    %v436 = vld [vmem:[%s2 + $0x570] sm:$0xf]
    %v437 = vld [vmem:[%s2 + $0x574] sm:$0xf]
    %v438 = vld [vmem:[%s2 + $0x578] sm:$0xf]
    %v439 = vld [vmem:[%s2 + $0x57c] sm:$0xf]
    %v440 = vld [vmem:[%s2 + $0x580] sm:$0xf]
    %v441 = vld [vmem:[%s2 + $0x584] sm:$0xf]
    %v442 = vld [vmem:[%s2 + $0x588] sm:$0xf]
    %v443 = vld [vmem:[%s2 + $0x58c] sm:$0xf]
    %v444 = vld [vmem:[%s2 + $0x590] sm:$0xf]
    %v445 = vld [vmem:[%s2 + $0x594] sm:$0xf]
    %v446 = vld [vmem:[%s2 + $0x598] sm:$0xf]
    %v447 = vld [vmem:[%s2 + $0x59c] sm:$0xf]
    %v448 = vld [vmem:[%s2 + $0x5a0] sm:$0xf]
    %v449 = vld [vmem:[%s2 + $0x5a4] sm:$0xf]
    %v450 = vld [vmem:[%s2 + $0x5a8] sm:$0xf]
    %v451 = vld [vmem:[%s2 + $0x5ac] sm:$0xf]
    %v452 = vld [vmem:[%s2 + $0x5b0] sm:$0xf]
    %v453 = vld [vmem:[%s2 + $0x5b4] sm:$0xf]
    %v454 = vld [vmem:[%s2 + $0x5b8] sm:$0xf]
    %v455 = vld [vmem:[%s2 + $0x5bc] sm:$0xf]
    %v456 = vld [vmem:[%s2 + $0x5c0] sm:$0xf]
    %v457 = vld [vmem:[%s2 + $0x5c4] sm:$0xf]
    %v458 = vld [vmem:[%s2 + $0x5c8] sm:$0xf]
    %v459 = vld [vmem:[%s2 + $0x5cc] sm:$0xf]
    %v460 = vld [vmem:[%s2 + $0x5d0] sm:$0xf]
    %v461 = vld [vmem:[%s2 + $0x5d4] sm:$0xf]
    %v462 = vld [vmem:[%s2 + $0x5d8] sm:$0xf]
    %v463 = vld [vmem:[%s2 + $0x5dc] sm:$0xf]
    %v464 = vld [vmem:[%s2 + $0x5e0] sm:$0xf]
    %v465 = vld [vmem:[%s2 + $0x5e4] sm:$0xf]
    %v466 = vld [vmem:[%s2 + $0x5e8] sm:$0xf]
    %v467 = vld [vmem:[%s2 + $0x5ec] sm:$0xf]
    %v468 = vld [vmem:[%s2 + $0x5f0] sm:$0xf]
    %v469 = vld [vmem:[%s2 + $0x5f4] sm:$0xf]
    %v470 = vld [vmem:[%s2 + $0x5f8] sm:$0xf]
    %v471 = vld [vmem:[%s2 + $0x5fc] sm:$0xf]
    %v472 = vld [vmem:[%s1] sm:$0xff]
    %v473 = vpack.c.bf16 %v472, %v472
    %v474 = vld [vmem:[%s3] sm:$0xf]
    %v475 = vld [vmem:[%s3 + $0x4] sm:$0xf]
    %v476 = vld [vmem:[%s3 + $0x8] sm:$0xf]
    %v477 = vld [vmem:[%s3 + $0xc] sm:$0xf]
    %v478 = vld [vmem:[%s3 + $0x10] sm:$0xf]
    %v479 = vld [vmem:[%s3 + $0x14] sm:$0xf]
    %v480 = vld [vmem:[%s3 + $0x18] sm:$0xf]
    %v481 = vld [vmem:[%s3 + $0x1c] sm:$0xf]
    %v482 = vld [vmem:[%s3 + $0x20] sm:$0xf]
    %v483 = vld [vmem:[%s3 + $0x24] sm:$0xf]
    %v484 = vld [vmem:[%s3 + $0x28] sm:$0xf]
    %v485 = vld [vmem:[%s3 + $0x2c] sm:$0xf]
    %v486 = vld [vmem:[%s3 + $0x30] sm:$0xf]
    %v487 = vld [vmem:[%s3 + $0x34] sm:$0xf]
    %v488 = vld [vmem:[%s3 + $0x38] sm:$0xf]
    %v489 = vld [vmem:[%s3 + $0x3c] sm:$0xf]
    %v506 = vunpack.c.l.b16 %v474
    %v507 = vunpack.c.l.b16 %v475
    %v508 = vunpack.c.l.b16 %v476
    %v509 = vunpack.c.l.b16 %v477
    %v510 = vunpack.c.l.b16 %v478
    %v511 = vunpack.c.l.b16 %v479
    %v512 = vunpack.c.l.b16 %v480
    %v513 = vunpack.c.l.b16 %v481
    %v514 = vunpack.c.l.b16 %v482
    %v515 = vunpack.c.l.b16 %v483
    %v516 = vunpack.c.l.b16 %v484
    %v517 = vunpack.c.l.b16 %v485
    %v518 = vunpack.c.l.b16 %v486
    %v519 = vunpack.c.l.b16 %v487
    %v520 = vunpack.c.l.b16 %v488
    %v521 = vunpack.c.l.b16 %v489
    %v522 = vpack.c.b16 %v507, %v506
    %v523 = vpack.c.b16 %v509, %v508
    %v524 = vpack.c.b16 %v511, %v510
    %v525 = vpack.c.b16 %v513, %v512
    %v526 = vpack.c.b16 %v515, %v514
    %v527 = vpack.c.b16 %v517, %v516
    %v528 = vpack.c.b16 %v519, %v518
    %v529 = vpack.c.b16 %v521, %v520
    %538 = vmatprep.subr.bf16.mxu0 0
    %539 = vmatpush1.bf16.msra.mxu0 %v529
    %540 = vmatprep.subr.bf16.mxu0 0
    %541 = vmatpush1.bf16.msra.mxu0 %v528
    %542 = vmatprep.subr.bf16.mxu0 0
    %543 = vmatpush1.bf16.msra.mxu0 %v527
    %544 = vmatprep.subr.bf16.mxu0 0
    %545 = vmatpush1.bf16.msra.mxu0 %v526
    %546 = vmatprep.subr.bf16.mxu0 0
    %547 = vmatpush1.bf16.msra.mxu0 %v525
    %548 = vmatprep.subr.bf16.mxu0 0
    %549 = vmatpush1.bf16.msra.mxu0 %v524
    %550 = vmatprep.subr.bf16.mxu0 0
    %551 = vmatpush1.bf16.msra.mxu0 %v523
    %552 = vmatprep.subr.bf16.mxu0 0
    %553 = vmatpush1.bf16.msra.mxu0 %v522
    %554 = vmatprep.subr.bf16.mxu0 0
    %555 = vmatpush2.bf16.msra.mxu0 0
    %556 = vmatprep.subr.bf16.mxu0 0
    %557 = vmatpush2.bf16.msra.mxu0 0
    %558 = vmatprep.subr.bf16.mxu0 0
    %559 = vmatpush2.bf16.msra.mxu0 0
    %560 = vmatprep.subr.bf16.mxu0 0
    %561 = vmatpush2.bf16.msra.mxu0 0
    %562 = vmatprep.subr.bf16.mxu0 0
    %563 = vmatpush2.bf16.msra.mxu0 0
    %564 = vmatprep.subr.bf16.mxu0 0
    %565 = vmatpush2.bf16.msra.mxu0 0
    %566 = vmatprep.subr.bf16.mxu0 0
    %567 = vmatpush2.bf16.msra.mxu0 0
    %568 = vmatprep.subr.bf16.mxu0 0
    %569 = vmatpush2.bf16.msra.mxu0 0
    %570 = vmatprep.mubr.bf16.mxu0 0
    %571 = vmatmul.mubr.bf16.gmra.mxu0 %v473
    %v572 = vpop.f32.mrf.mxu0
    %v573 = vadd.f32 0.0, %v572
    %v574 = vpop.f32.mrf.mxu0
    %v575 = vpop.f32.mrf.mxu0
    %v576 = vpop.f32.mrf.mxu0
    %577 = vdwg.mxu0
    %v962 = vunpack.c.l.b16 %v88
    %v963 = vunpack.c.l.b16 %v89
    %v964 = vunpack.c.l.b16 %v90
    %v965 = vunpack.c.l.b16 %v91
    %v966 = vunpack.c.l.b16 %v92
    %v967 = vunpack.c.l.b16 %v93
    %v968 = vunpack.c.l.b16 %v94
    %v969 = vunpack.c.l.b16 %v95
    %v970 = vunpack.c.l.b16 %v96
    %v971 = vunpack.c.l.b16 %v97
    %v972 = vunpack.c.l.b16 %v98
    %v973 = vunpack.c.l.b16 %v99
    %v974 = vunpack.c.l.b16 %v100
    %v975 = vunpack.c.l.b16 %v101
    %v976 = vunpack.c.l.b16 %v102
    %v977 = vunpack.c.l.b16 %v103
    %v978 = vunpack.c.l.b16 %v104
    %v979 = vunpack.c.l.b16 %v105
    %v980 = vunpack.c.l.b16 %v106
    %v981 = vunpack.c.l.b16 %v107
    %v982 = vunpack.c.l.b16 %v108
    %v983 = vunpack.c.l.b16 %v109
    %v984 = vunpack.c.l.b16 %v110
    %v985 = vunpack.c.l.b16 %v111
    %v986 = vunpack.c.l.b16 %v112
    %v987 = vunpack.c.l.b16 %v113
    %v988 = vunpack.c.l.b16 %v114
    %v989 = vunpack.c.l.b16 %v115
    %v990 = vunpack.c.l.b16 %v116
    %v991 = vunpack.c.l.b16 %v117
    %v992 = vunpack.c.l.b16 %v118
    %v993 = vunpack.c.l.b16 %v119
    %v994 = vunpack.c.l.b16 %v120
    %v995 = vunpack.c.l.b16 %v121
    %v996 = vunpack.c.l.b16 %v122
    %v997 = vunpack.c.l.b16 %v123
    %v998 = vunpack.c.l.b16 %v124
    %v999 = vunpack.c.l.b16 %v125
    %v1000 = vunpack.c.l.b16 %v126
    %v1001 = vunpack.c.l.b16 %v127
    %v1002 = vunpack.c.l.b16 %v128
    %v1003 = vunpack.c.l.b16 %v129
    %v1004 = vunpack.c.l.b16 %v130
    %v1005 = vunpack.c.l.b16 %v131
    %v1006 = vunpack.c.l.b16 %v132
    %v1007 = vunpack.c.l.b16 %v133
    %v1008 = vunpack.c.l.b16 %v134
    %v1009 = vunpack.c.l.b16 %v135
    %v1010 = vunpack.c.l.b16 %v136
    %v1011 = vunpack.c.l.b16 %v137
    %v1012 = vunpack.c.l.b16 %v138
    %v1013 = vunpack.c.l.b16 %v139
    %v1014 = vunpack.c.l.b16 %v140
    %v1015 = vunpack.c.l.b16 %v141
    %v1016 = vunpack.c.l.b16 %v142
    %v1017 = vunpack.c.l.b16 %v143
    %v1018 = vunpack.c.l.b16 %v144
    %v1019 = vunpack.c.l.b16 %v145
    %v1020 = vunpack.c.l.b16 %v146
    %v1021 = vunpack.c.l.b16 %v147
    %v1022 = vunpack.c.l.b16 %v148
    %v1023 = vunpack.c.l.b16 %v149
    %v1024 = vunpack.c.l.b16 %v150
    %v1025 = vunpack.c.l.b16 %v151
    %v1026 = vunpack.c.l.b16 %v152
    %v1027 = vunpack.c.l.b16 %v153
    %v1028 = vunpack.c.l.b16 %v154
    %v1029 = vunpack.c.l.b16 %v155
    %v1030 = vunpack.c.l.b16 %v156
    %v1031 = vunpack.c.l.b16 %v157
    %v1032 = vunpack.c.l.b16 %v158
    %v1033 = vunpack.c.l.b16 %v159
    %v1034 = vunpack.c.l.b16 %v160
    %v1035 = vunpack.c.l.b16 %v161
    %v1036 = vunpack.c.l.b16 %v162
    %v1037 = vunpack.c.l.b16 %v163
    %v1038 = vunpack.c.l.b16 %v164
    %v1039 = vunpack.c.l.b16 %v165
    %v1040 = vunpack.c.l.b16 %v166
    %v1041 = vunpack.c.l.b16 %v167
    %v1042 = vunpack.c.l.b16 %v168
    %v1043 = vunpack.c.l.b16 %v169
    %v1044 = vunpack.c.l.b16 %v170
    %v1045 = vunpack.c.l.b16 %v171
    %v1046 = vunpack.c.l.b16 %v172
    %v1047 = vunpack.c.l.b16 %v173
    %v1048 = vunpack.c.l.b16 %v174
    %v1049 = vunpack.c.l.b16 %v175
    %v1050 = vunpack.c.l.b16 %v176
    %v1051 = vunpack.c.l.b16 %v177
    %v1052 = vunpack.c.l.b16 %v178
    %v1053 = vunpack.c.l.b16 %v179
    %v1054 = vunpack.c.l.b16 %v180
    %v1055 = vunpack.c.l.b16 %v181
    %v1056 = vunpack.c.l.b16 %v182
    %v1057 = vunpack.c.l.b16 %v183
    %v1058 = vunpack.c.l.b16 %v184
    %v1059 = vunpack.c.l.b16 %v185
    %v1060 = vunpack.c.l.b16 %v186
    %v1061 = vunpack.c.l.b16 %v187
    %v1062 = vunpack.c.l.b16 %v188
    %v1063 = vunpack.c.l.b16 %v189
    %v1064 = vunpack.c.l.b16 %v190
    %v1065 = vunpack.c.l.b16 %v191
    %v1066 = vunpack.c.l.b16 %v192
    %v1067 = vunpack.c.l.b16 %v193
    %v1068 = vunpack.c.l.b16 %v194
    %v1069 = vunpack.c.l.b16 %v195
    %v1070 = vunpack.c.l.b16 %v196
    %v1071 = vunpack.c.l.b16 %v197
    %v1072 = vunpack.c.l.b16 %v198
    %v1073 = vunpack.c.l.b16 %v199
    %v1074 = vunpack.c.l.b16 %v200
    %v1075 = vunpack.c.l.b16 %v201
    %v1076 = vunpack.c.l.b16 %v202
    %v1077 = vunpack.c.l.b16 %v203
    %v1078 = vunpack.c.l.b16 %v204
    %v1079 = vunpack.c.l.b16 %v205
    %v1080 = vunpack.c.l.b16 %v206
    %v1081 = vunpack.c.l.b16 %v207
    %v1082 = vunpack.c.l.b16 %v208
    %v1083 = vunpack.c.l.b16 %v209
    %v1084 = vunpack.c.l.b16 %v210
    %v1085 = vunpack.c.l.b16 %v211
    %v1086 = vunpack.c.l.b16 %v212
    %v1087 = vunpack.c.l.b16 %v213
    %v1088 = vunpack.c.l.b16 %v214
    %v1089 = vunpack.c.l.b16 %v215
    %v1090 = vunpack.c.l.b16 %v216
    %v1091 = vunpack.c.l.b16 %v217
    %v1092 = vunpack.c.l.b16 %v218
    %v1093 = vunpack.c.l.b16 %v219
    %v1094 = vunpack.c.l.b16 %v220
    %v1095 = vunpack.c.l.b16 %v221
    %v1096 = vunpack.c.l.b16 %v222
    %v1097 = vunpack.c.l.b16 %v223
    %v1098 = vunpack.c.l.b16 %v224
    %v1099 = vunpack.c.l.b16 %v225
    %v1100 = vunpack.c.l.b16 %v226
    %v1101 = vunpack.c.l.b16 %v227
    %v1102 = vunpack.c.l.b16 %v228
    %v1103 = vunpack.c.l.b16 %v229
    %v1104 = vunpack.c.l.b16 %v230
    %v1105 = vunpack.c.l.b16 %v231
    %v1106 = vunpack.c.l.b16 %v232
    %v1107 = vunpack.c.l.b16 %v233
    %v1108 = vunpack.c.l.b16 %v234
    %v1109 = vunpack.c.l.b16 %v235
    %v1110 = vunpack.c.l.b16 %v236
    %v1111 = vunpack.c.l.b16 %v237
    %v1112 = vunpack.c.l.b16 %v238
    %v1113 = vunpack.c.l.b16 %v239
    %v1114 = vunpack.c.l.b16 %v240
    %v1115 = vunpack.c.l.b16 %v241
    %v1116 = vunpack.c.l.b16 %v242
    %v1117 = vunpack.c.l.b16 %v243
    %v1118 = vunpack.c.l.b16 %v244
    %v1119 = vunpack.c.l.b16 %v245
    %v1120 = vunpack.c.l.b16 %v246
    %v1121 = vunpack.c.l.b16 %v247
    %v1122 = vunpack.c.l.b16 %v248
    %v1123 = vunpack.c.l.b16 %v249
    %v1124 = vunpack.c.l.b16 %v250
    %v1125 = vunpack.c.l.b16 %v251
    %v1126 = vunpack.c.l.b16 %v252
    %v1127 = vunpack.c.l.b16 %v253
    %v1128 = vunpack.c.l.b16 %v254
    %v1129 = vunpack.c.l.b16 %v255
    %v1130 = vunpack.c.l.b16 %v256
    %v1131 = vunpack.c.l.b16 %v257
    %v1132 = vunpack.c.l.b16 %v258
    %v1133 = vunpack.c.l.b16 %v259
    %v1134 = vunpack.c.l.b16 %v260
    %v1135 = vunpack.c.l.b16 %v261
    %v1136 = vunpack.c.l.b16 %v262
    %v1137 = vunpack.c.l.b16 %v263
    %v1138 = vunpack.c.l.b16 %v264
    %v1139 = vunpack.c.l.b16 %v265
    %v1140 = vunpack.c.l.b16 %v266
    %v1141 = vunpack.c.l.b16 %v267
    %v1142 = vunpack.c.l.b16 %v268
    %v1143 = vunpack.c.l.b16 %v269
    %v1144 = vunpack.c.l.b16 %v270
    %v1145 = vunpack.c.l.b16 %v271
    %v1146 = vunpack.c.l.b16 %v272
    %v1147 = vunpack.c.l.b16 %v273
    %v1148 = vunpack.c.l.b16 %v274
    %v1149 = vunpack.c.l.b16 %v275
    %v1150 = vunpack.c.l.b16 %v276
    %v1151 = vunpack.c.l.b16 %v277
    %v1152 = vunpack.c.l.b16 %v278
    %v1153 = vunpack.c.l.b16 %v279
    %v1154 = vunpack.c.l.b16 %v280
    %v1155 = vunpack.c.l.b16 %v281
    %v1156 = vunpack.c.l.b16 %v282
    %v1157 = vunpack.c.l.b16 %v283
    %v1158 = vunpack.c.l.b16 %v284
    %v1159 = vunpack.c.l.b16 %v285
    %v1160 = vunpack.c.l.b16 %v286
    %v1161 = vunpack.c.l.b16 %v287
    %v1162 = vunpack.c.l.b16 %v288
    %v1163 = vunpack.c.l.b16 %v289
    %v1164 = vunpack.c.l.b16 %v290
    %v1165 = vunpack.c.l.b16 %v291
    %v1166 = vunpack.c.l.b16 %v292
    %v1167 = vunpack.c.l.b16 %v293
    %v1168 = vunpack.c.l.b16 %v294
    %v1169 = vunpack.c.l.b16 %v295
    %v1170 = vunpack.c.l.b16 %v296
    %v1171 = vunpack.c.l.b16 %v297
    %v1172 = vunpack.c.l.b16 %v298
    %v1173 = vunpack.c.l.b16 %v299
    %v1174 = vunpack.c.l.b16 %v300
    %v1175 = vunpack.c.l.b16 %v301
    %v1176 = vunpack.c.l.b16 %v302
    %v1177 = vunpack.c.l.b16 %v303
    %v1178 = vunpack.c.l.b16 %v304
    %v1179 = vunpack.c.l.b16 %v305
    %v1180 = vunpack.c.l.b16 %v306
    %v1181 = vunpack.c.l.b16 %v307
    %v1182 = vunpack.c.l.b16 %v308
    %v1183 = vunpack.c.l.b16 %v309
    %v1184 = vunpack.c.l.b16 %v310
    %v1185 = vunpack.c.l.b16 %v311
    %v1186 = vunpack.c.l.b16 %v312
    %v1187 = vunpack.c.l.b16 %v313
    %v1188 = vunpack.c.l.b16 %v314
    %v1189 = vunpack.c.l.b16 %v315
    %v1190 = vunpack.c.l.b16 %v316
    %v1191 = vunpack.c.l.b16 %v317
    %v1192 = vunpack.c.l.b16 %v318
    %v1193 = vunpack.c.l.b16 %v319
    %v1194 = vunpack.c.l.b16 %v320
    %v1195 = vunpack.c.l.b16 %v321
    %v1196 = vunpack.c.l.b16 %v322
    %v1197 = vunpack.c.l.b16 %v323
    %v1198 = vunpack.c.l.b16 %v324
    %v1199 = vunpack.c.l.b16 %v325
    %v1200 = vunpack.c.l.b16 %v326
    %v1201 = vunpack.c.l.b16 %v327
    %v1202 = vunpack.c.l.b16 %v328
    %v1203 = vunpack.c.l.b16 %v329
    %v1204 = vunpack.c.l.b16 %v330
    %v1205 = vunpack.c.l.b16 %v331
    %v1206 = vunpack.c.l.b16 %v332
    %v1207 = vunpack.c.l.b16 %v333
    %v1208 = vunpack.c.l.b16 %v334
    %v1209 = vunpack.c.l.b16 %v335
    %v1210 = vunpack.c.l.b16 %v336
    %v1211 = vunpack.c.l.b16 %v337
    %v1212 = vunpack.c.l.b16 %v338
    %v1213 = vunpack.c.l.b16 %v339
    %v1214 = vunpack.c.l.b16 %v340
    %v1215 = vunpack.c.l.b16 %v341
    %v1216 = vunpack.c.l.b16 %v342
    %v1217 = vunpack.c.l.b16 %v343
    %v1218 = vunpack.c.l.b16 %v344
    %v1219 = vunpack.c.l.b16 %v345
    %v1220 = vunpack.c.l.b16 %v346
    %v1221 = vunpack.c.l.b16 %v347
    %v1222 = vunpack.c.l.b16 %v348
    %v1223 = vunpack.c.l.b16 %v349
    %v1224 = vunpack.c.l.b16 %v350
    %v1225 = vunpack.c.l.b16 %v351
    %v1226 = vunpack.c.l.b16 %v352
    %v1227 = vunpack.c.l.b16 %v353
    %v1228 = vunpack.c.l.b16 %v354
    %v1229 = vunpack.c.l.b16 %v355
    %v1230 = vunpack.c.l.b16 %v356
    %v1231 = vunpack.c.l.b16 %v357
    %v1232 = vunpack.c.l.b16 %v358
    %v1233 = vunpack.c.l.b16 %v359
    %v1234 = vunpack.c.l.b16 %v360
    %v1235 = vunpack.c.l.b16 %v361
    %v1236 = vunpack.c.l.b16 %v362
    %v1237 = vunpack.c.l.b16 %v363
    %v1238 = vunpack.c.l.b16 %v364
    %v1239 = vunpack.c.l.b16 %v365
    %v1240 = vunpack.c.l.b16 %v366
    %v1241 = vunpack.c.l.b16 %v367
    %v1242 = vunpack.c.l.b16 %v368
    %v1243 = vunpack.c.l.b16 %v369
    %v1244 = vunpack.c.l.b16 %v370
    %v1245 = vunpack.c.l.b16 %v371
    %v1246 = vunpack.c.l.b16 %v372
    %v1247 = vunpack.c.l.b16 %v373
    %v1248 = vunpack.c.l.b16 %v374
    %v1249 = vunpack.c.l.b16 %v375
    %v1250 = vunpack.c.l.b16 %v376
    %v1251 = vunpack.c.l.b16 %v377
    %v1252 = vunpack.c.l.b16 %v378
    %v1253 = vunpack.c.l.b16 %v379
    %v1254 = vunpack.c.l.b16 %v380
    %v1255 = vunpack.c.l.b16 %v381
    %v1256 = vunpack.c.l.b16 %v382
    %v1257 = vunpack.c.l.b16 %v383
    %v1258 = vunpack.c.l.b16 %v384
    %v1259 = vunpack.c.l.b16 %v385
    %v1260 = vunpack.c.l.b16 %v386
    %v1261 = vunpack.c.l.b16 %v387
    %v1262 = vunpack.c.l.b16 %v388
    %v1263 = vunpack.c.l.b16 %v389
    %v1264 = vunpack.c.l.b16 %v390
    %v1265 = vunpack.c.l.b16 %v391
    %v1266 = vunpack.c.l.b16 %v392
    %v1267 = vunpack.c.l.b16 %v393
    %v1268 = vunpack.c.l.b16 %v394
    %v1269 = vunpack.c.l.b16 %v395
    %v1270 = vunpack.c.l.b16 %v396
    %v1271 = vunpack.c.l.b16 %v397
    %v1272 = vunpack.c.l.b16 %v398
    %v1273 = vunpack.c.l.b16 %v399
    %v1274 = vunpack.c.l.b16 %v400
    %v1275 = vunpack.c.l.b16 %v401
    %v1276 = vunpack.c.l.b16 %v402
    %v1277 = vunpack.c.l.b16 %v403
    %v1278 = vunpack.c.l.b16 %v404
    %v1279 = vunpack.c.l.b16 %v405
    %v1280 = vunpack.c.l.b16 %v406
    %v1281 = vunpack.c.l.b16 %v407
    %v1282 = vunpack.c.l.b16 %v408
    %v1283 = vunpack.c.l.b16 %v409
    %v1284 = vunpack.c.l.b16 %v410
    %v1285 = vunpack.c.l.b16 %v411
    %v1286 = vunpack.c.l.b16 %v412
    %v1287 = vunpack.c.l.b16 %v413
    %v1288 = vunpack.c.l.b16 %v414
    %v1289 = vunpack.c.l.b16 %v415
    %v1290 = vunpack.c.l.b16 %v416
    %v1291 = vunpack.c.l.b16 %v417
    %v1292 = vunpack.c.l.b16 %v418
    %v1293 = vunpack.c.l.b16 %v419
    %v1294 = vunpack.c.l.b16 %v420
    %v1295 = vunpack.c.l.b16 %v421
    %v1296 = vunpack.c.l.b16 %v422
    %v1297 = vunpack.c.l.b16 %v423
    %v1298 = vunpack.c.l.b16 %v424
    %v1299 = vunpack.c.l.b16 %v425
    %v1300 = vunpack.c.l.b16 %v426
    %v1301 = vunpack.c.l.b16 %v427
    %v1302 = vunpack.c.l.b16 %v428
    %v1303 = vunpack.c.l.b16 %v429
    %v1304 = vunpack.c.l.b16 %v430
    %v1305 = vunpack.c.l.b16 %v431
    %v1306 = vunpack.c.l.b16 %v432
    %v1307 = vunpack.c.l.b16 %v433
    %v1308 = vunpack.c.l.b16 %v434
    %v1309 = vunpack.c.l.b16 %v435
    %v1310 = vunpack.c.l.b16 %v436
    %v1311 = vunpack.c.l.b16 %v437
    %v1312 = vunpack.c.l.b16 %v438
    %v1313 = vunpack.c.l.b16 %v439
    %v1314 = vunpack.c.l.b16 %v440
    %v1315 = vunpack.c.l.b16 %v441
    %v1316 = vunpack.c.l.b16 %v442
    %v1317 = vunpack.c.l.b16 %v443
    %v1318 = vunpack.c.l.b16 %v444
    %v1319 = vunpack.c.l.b16 %v445
    %v1320 = vunpack.c.l.b16 %v446
    %v1321 = vunpack.c.l.b16 %v447
    %v1322 = vunpack.c.l.b16 %v448
    %v1323 = vunpack.c.l.b16 %v449
    %v1324 = vunpack.c.l.b16 %v450
    %v1325 = vunpack.c.l.b16 %v451
    %v1326 = vunpack.c.l.b16 %v452
    %v1327 = vunpack.c.l.b16 %v453
    %v1328 = vunpack.c.l.b16 %v454
    %v1329 = vunpack.c.l.b16 %v455
    %v1330 = vunpack.c.l.b16 %v456
    %v1331 = vunpack.c.l.b16 %v457
    %v1332 = vunpack.c.l.b16 %v458
    %v1333 = vunpack.c.l.b16 %v459
    %v1334 = vunpack.c.l.b16 %v460
    %v1335 = vunpack.c.l.b16 %v461
    %v1336 = vunpack.c.l.b16 %v462
    %v1337 = vunpack.c.l.b16 %v463
    %v1338 = vunpack.c.l.b16 %v464
    %v1339 = vunpack.c.l.b16 %v465
    %v1340 = vunpack.c.l.b16 %v466
    %v1341 = vunpack.c.l.b16 %v467
    %v1342 = vunpack.c.l.b16 %v468
    %v1343 = vunpack.c.l.b16 %v469
    %v1344 = vunpack.c.l.b16 %v470
    %v1345 = vunpack.c.l.b16 %v471
    %v1346 = vpack.c.b16 %v963, %v962
    %v1347 = vpack.c.b16 %v965, %v964
    %v1348 = vpack.c.b16 %v967, %v966
    %v1349 = vpack.c.b16 %v969, %v968
    %v1350 = vpack.c.b16 %v971, %v970
    %v1351 = vpack.c.b16 %v973, %v972
    %v1352 = vpack.c.b16 %v975, %v974
    %v1353 = vpack.c.b16 %v977, %v976
    %v1354 = vpack.c.b16 %v979, %v978
    %v1355 = vpack.c.b16 %v981, %v980
    %v1356 = vpack.c.b16 %v983, %v982
    %v1357 = vpack.c.b16 %v985, %v984
    %v1358 = vpack.c.b16 %v987, %v986
    %v1359 = vpack.c.b16 %v989, %v988
    %v1360 = vpack.c.b16 %v991, %v990
    %v1361 = vpack.c.b16 %v993, %v992
    %v1362 = vpack.c.b16 %v995, %v994
    %v1363 = vpack.c.b16 %v997, %v996
    %v1364 = vpack.c.b16 %v999, %v998
    %v1365 = vpack.c.b16 %v1001, %v1000
    %v1366 = vpack.c.b16 %v1003, %v1002
    %v1367 = vpack.c.b16 %v1005, %v1004
    %v1368 = vpack.c.b16 %v1007, %v1006
    %v1369 = vpack.c.b16 %v1009, %v1008
    %v1370 = vpack.c.b16 %v1011, %v1010
    %v1371 = vpack.c.b16 %v1013, %v1012
    %v1372 = vpack.c.b16 %v1015, %v1014
    %v1373 = vpack.c.b16 %v1017, %v1016
    %v1374 = vpack.c.b16 %v1019, %v1018
    %v1375 = vpack.c.b16 %v1021, %v1020
    %v1376 = vpack.c.b16 %v1023, %v1022
    %v1377 = vpack.c.b16 %v1025, %v1024
    %v1378 = vpack.c.b16 %v1027, %v1026
    %v1379 = vpack.c.b16 %v1029, %v1028
    %v1380 = vpack.c.b16 %v1031, %v1030
    %v1381 = vpack.c.b16 %v1033, %v1032
    %v1382 = vpack.c.b16 %v1035, %v1034
    %v1383 = vpack.c.b16 %v1037, %v1036
    %v1384 = vpack.c.b16 %v1039, %v1038
    %v1385 = vpack.c.b16 %v1041, %v1040
    %v1386 = vpack.c.b16 %v1043, %v1042
    %v1387 = vpack.c.b16 %v1045, %v1044
    %v1388 = vpack.c.b16 %v1047, %v1046
    %v1389 = vpack.c.b16 %v1049, %v1048
    %v1390 = vpack.c.b16 %v1051, %v1050
    %v1391 = vpack.c.b16 %v1053, %v1052
    %v1392 = vpack.c.b16 %v1055, %v1054
    %v1393 = vpack.c.b16 %v1057, %v1056
    %v1394 = vpack.c.b16 %v1059, %v1058
    %v1395 = vpack.c.b16 %v1061, %v1060
    %v1396 = vpack.c.b16 %v1063, %v1062
    %v1397 = vpack.c.b16 %v1065, %v1064
    %v1398 = vpack.c.b16 %v1067, %v1066
    %v1399 = vpack.c.b16 %v1069, %v1068
    %v1400 = vpack.c.b16 %v1071, %v1070
    %v1401 = vpack.c.b16 %v1073, %v1072
    %v1402 = vpack.c.b16 %v1075, %v1074
    %v1403 = vpack.c.b16 %v1077, %v1076
    %v1404 = vpack.c.b16 %v1079, %v1078
    %v1405 = vpack.c.b16 %v1081, %v1080
    %v1406 = vpack.c.b16 %v1083, %v1082
    %v1407 = vpack.c.b16 %v1085, %v1084
    %v1408 = vpack.c.b16 %v1087, %v1086
    %v1409 = vpack.c.b16 %v1089, %v1088
    %v1410 = vpack.c.b16 %v1091, %v1090
    %v1411 = vpack.c.b16 %v1093, %v1092
    %v1412 = vpack.c.b16 %v1095, %v1094
    %v1413 = vpack.c.b16 %v1097, %v1096
    %v1414 = vpack.c.b16 %v1099, %v1098
    %v1415 = vpack.c.b16 %v1101, %v1100
    %v1416 = vpack.c.b16 %v1103, %v1102
    %v1417 = vpack.c.b16 %v1105, %v1104
    %v1418 = vpack.c.b16 %v1107, %v1106
    %v1419 = vpack.c.b16 %v1109, %v1108
    %v1420 = vpack.c.b16 %v1111, %v1110
    %v1421 = vpack.c.b16 %v1113, %v1112
    %v1422 = vpack.c.b16 %v1115, %v1114
    %v1423 = vpack.c.b16 %v1117, %v1116
    %v1424 = vpack.c.b16 %v1119, %v1118
    %v1425 = vpack.c.b16 %v1121, %v1120
    %v1426 = vpack.c.b16 %v1123, %v1122
    %v1427 = vpack.c.b16 %v1125, %v1124
    %v1428 = vpack.c.b16 %v1127, %v1126
    %v1429 = vpack.c.b16 %v1129, %v1128
    %v1430 = vpack.c.b16 %v1131, %v1130
    %v1431 = vpack.c.b16 %v1133, %v1132
    %v1432 = vpack.c.b16 %v1135, %v1134
    %v1433 = vpack.c.b16 %v1137, %v1136
    %v1434 = vpack.c.b16 %v1139, %v1138
    %v1435 = vpack.c.b16 %v1141, %v1140
    %v1436 = vpack.c.b16 %v1143, %v1142
    %v1437 = vpack.c.b16 %v1145, %v1144
    %v1438 = vpack.c.b16 %v1147, %v1146
    %v1439 = vpack.c.b16 %v1149, %v1148
    %v1440 = vpack.c.b16 %v1151, %v1150
    %v1441 = vpack.c.b16 %v1153, %v1152
    %v1442 = vpack.c.b16 %v1155, %v1154
    %v1443 = vpack.c.b16 %v1157, %v1156
    %v1444 = vpack.c.b16 %v1159, %v1158
    %v1445 = vpack.c.b16 %v1161, %v1160
    %v1446 = vpack.c.b16 %v1163, %v1162
    %v1447 = vpack.c.b16 %v1165, %v1164
    %v1448 = vpack.c.b16 %v1167, %v1166
    %v1449 = vpack.c.b16 %v1169, %v1168
    %v1450 = vpack.c.b16 %v1171, %v1170
    %v1451 = vpack.c.b16 %v1173, %v1172
    %v1452 = vpack.c.b16 %v1175, %v1174
    %v1453 = vpack.c.b16 %v1177, %v1176
    %v1454 = vpack.c.b16 %v1179, %v1178
    %v1455 = vpack.c.b16 %v1181, %v1180
    %v1456 = vpack.c.b16 %v1183, %v1182
    %v1457 = vpack.c.b16 %v1185, %v1184
    %v1458 = vpack.c.b16 %v1187, %v1186
    %v1459 = vpack.c.b16 %v1189, %v1188
    %v1460 = vpack.c.b16 %v1191, %v1190
    %v1461 = vpack.c.b16 %v1193, %v1192
    %v1462 = vpack.c.b16 %v1195, %v1194
    %v1463 = vpack.c.b16 %v1197, %v1196
    %v1464 = vpack.c.b16 %v1199, %v1198
    %v1465 = vpack.c.b16 %v1201, %v1200
    %v1466 = vpack.c.b16 %v1203, %v1202
    %v1467 = vpack.c.b16 %v1205, %v1204
    %v1468 = vpack.c.b16 %v1207, %v1206
    %v1469 = vpack.c.b16 %v1209, %v1208
    %v1470 = vpack.c.b16 %v1211, %v1210
    %v1471 = vpack.c.b16 %v1213, %v1212
    %v1472 = vpack.c.b16 %v1215, %v1214
    %v1473 = vpack.c.b16 %v1217, %v1216
    %v1474 = vpack.c.b16 %v1219, %v1218
    %v1475 = vpack.c.b16 %v1221, %v1220
    %v1476 = vpack.c.b16 %v1223, %v1222
    %v1477 = vpack.c.b16 %v1225, %v1224
    %v1478 = vpack.c.b16 %v1227, %v1226
    %v1479 = vpack.c.b16 %v1229, %v1228
    %v1480 = vpack.c.b16 %v1231, %v1230
    %v1481 = vpack.c.b16 %v1233, %v1232
    %v1482 = vpack.c.b16 %v1235, %v1234
    %v1483 = vpack.c.b16 %v1237, %v1236
    %v1484 = vpack.c.b16 %v1239, %v1238
    %v1485 = vpack.c.b16 %v1241, %v1240
    %v1486 = vpack.c.b16 %v1243, %v1242
    %v1487 = vpack.c.b16 %v1245, %v1244
    %v1488 = vpack.c.b16 %v1247, %v1246
    %v1489 = vpack.c.b16 %v1249, %v1248
    %v1490 = vpack.c.b16 %v1251, %v1250
    %v1491 = vpack.c.b16 %v1253, %v1252
    %v1492 = vpack.c.b16 %v1255, %v1254
    %v1493 = vpack.c.b16 %v1257, %v1256
    %v1494 = vpack.c.b16 %v1259, %v1258
    %v1495 = vpack.c.b16 %v1261, %v1260
    %v1496 = vpack.c.b16 %v1263, %v1262
    %v1497 = vpack.c.b16 %v1265, %v1264
    %v1498 = vpack.c.b16 %v1267, %v1266
    %v1499 = vpack.c.b16 %v1269, %v1268
    %v1500 = vpack.c.b16 %v1271, %v1270
    %v1501 = vpack.c.b16 %v1273, %v1272
    %v1502 = vpack.c.b16 %v1275, %v1274
    %v1503 = vpack.c.b16 %v1277, %v1276
    %v1504 = vpack.c.b16 %v1279, %v1278
    %v1505 = vpack.c.b16 %v1281, %v1280
    %v1506 = vpack.c.b16 %v1283, %v1282
    %v1507 = vpack.c.b16 %v1285, %v1284
    %v1508 = vpack.c.b16 %v1287, %v1286
    %v1509 = vpack.c.b16 %v1289, %v1288
    %v1510 = vpack.c.b16 %v1291, %v1290
    %v1511 = vpack.c.b16 %v1293, %v1292
    %v1512 = vpack.c.b16 %v1295, %v1294
    %v1513 = vpack.c.b16 %v1297, %v1296
    %v1514 = vpack.c.b16 %v1299, %v1298
    %v1515 = vpack.c.b16 %v1301, %v1300
    %v1516 = vpack.c.b16 %v1303, %v1302
    %v1517 = vpack.c.b16 %v1305, %v1304
    %v1518 = vpack.c.b16 %v1307, %v1306
    %v1519 = vpack.c.b16 %v1309, %v1308
    %v1520 = vpack.c.b16 %v1311, %v1310
    %v1521 = vpack.c.b16 %v1313, %v1312
    %v1522 = vpack.c.b16 %v1315, %v1314
    %v1523 = vpack.c.b16 %v1317, %v1316
    %v1524 = vpack.c.b16 %v1319, %v1318
    %v1525 = vpack.c.b16 %v1321, %v1320
    %v1526 = vpack.c.b16 %v1323, %v1322
    %v1527 = vpack.c.b16 %v1325, %v1324
    %v1528 = vpack.c.b16 %v1327, %v1326
    %v1529 = vpack.c.b16 %v1329, %v1328
    %v1530 = vpack.c.b16 %v1331, %v1330
    %v1531 = vpack.c.b16 %v1333, %v1332
    %v1532 = vpack.c.b16 %v1335, %v1334
    %v1533 = vpack.c.b16 %v1337, %v1336
    %v1534 = vpack.c.b16 %v1339, %v1338
    %v1535 = vpack.c.b16 %v1341, %v1340
    %v1536 = vpack.c.b16 %v1343, %v1342
    %v1537 = vpack.c.b16 %v1345, %v1344
    %1730 = vmatprep.subr.bf16.mxu0 0
    %1731 = vmatpush1.bf16.msra.mxu0 %v1353
    %1732 = vmatprep.subr.bf16.mxu0 0
    %1733 = vmatpush1.bf16.msra.mxu0 %v1352
    %1734 = vmatprep.subr.bf16.mxu0 0
    %1735 = vmatpush1.bf16.msra.mxu0 %v1351
    %1736 = vmatprep.subr.bf16.mxu0 0
    %1737 = vmatpush1.bf16.msra.mxu0 %v1350
    %1738 = vmatprep.subr.bf16.mxu0 0
    %1739 = vmatpush1.bf16.msra.mxu0 %v1349
    %1740 = vmatprep.subr.bf16.mxu0 0
    %1741 = vmatpush1.bf16.msra.mxu0 %v1348
    %1742 = vmatprep.subr.bf16.mxu0 0
    %1743 = vmatpush1.bf16.msra.mxu0 %v1347
    %1744 = vmatprep.subr.bf16.mxu0 0
    %1745 = vmatpush1.bf16.msra.mxu0 %v1346
    %1746 = vmatprep.subr.bf16.mxu0 0
    %1747 = vmatpush2.bf16.msra.mxu0 %v1361
    %1748 = vmatprep.subr.bf16.mxu0 0
    %1749 = vmatpush2.bf16.msra.mxu0 %v1360
    %1750 = vmatprep.subr.bf16.mxu0 0
    %1751 = vmatpush2.bf16.msra.mxu0 %v1359
    %1752 = vmatprep.subr.bf16.mxu0 0
    %1753 = vmatpush2.bf16.msra.mxu0 %v1358
    %1754 = vmatprep.subr.bf16.mxu0 0
    %1755 = vmatpush2.bf16.msra.mxu0 %v1357
    %1756 = vmatprep.subr.bf16.mxu0 0
    %1757 = vmatpush2.bf16.msra.mxu0 %v1356
    %1758 = vmatprep.subr.bf16.mxu0 0
    %1759 = vmatpush2.bf16.msra.mxu0 %v1355
    %1760 = vmatprep.subr.bf16.mxu0 0
    %1761 = vmatpush2.bf16.msra.mxu0 %v1354
    %1762 = vmatprep.mubr.bf16.mxu0 %v65
    %1763 = vmatmul.mubr.bf16.gmra.mxu0 %v64
    %v1764 = vpop.f32.mrf.mxu0
    %v1765 = vadd.f32 %v573, %v1764
    %v1766 = vpop.f32.mrf.mxu0
    %v1767 = vpop.f32.mrf.mxu0
    %v1768 = vpop.f32.mrf.mxu0
    %1769 = vdwg.mxu0
    %1770 = vmatprep.subr.bf16.mxu0 0
    %1771 = vmatpush1.bf16.msra.mxu0 %v1369
    %1772 = vmatprep.subr.bf16.mxu0 0
    %1773 = vmatpush1.bf16.msra.mxu0 %v1368
    %1774 = vmatprep.subr.bf16.mxu0 0
    %1775 = vmatpush1.bf16.msra.mxu0 %v1367
    %1776 = vmatprep.subr.bf16.mxu0 0
    %1777 = vmatpush1.bf16.msra.mxu0 %v1366
    %1778 = vmatprep.subr.bf16.mxu0 0
    %1779 = vmatpush1.bf16.msra.mxu0 %v1365
    %1780 = vmatprep.subr.bf16.mxu0 0
    %1781 = vmatpush1.bf16.msra.mxu0 %v1364
    %1782 = vmatprep.subr.bf16.mxu0 0
    %1783 = vmatpush1.bf16.msra.mxu0 %v1363
    %1784 = vmatprep.subr.bf16.mxu0 0
    %1785 = vmatpush1.bf16.msra.mxu0 %v1362
    %1786 = vmatprep.subr.bf16.mxu0 0
    %1787 = vmatpush2.bf16.msra.mxu0 %v1377
    %1788 = vmatprep.subr.bf16.mxu0 0
    %1789 = vmatpush2.bf16.msra.mxu0 %v1376
    %1790 = vmatprep.subr.bf16.mxu0 0
    %1791 = vmatpush2.bf16.msra.mxu0 %v1375
    %1792 = vmatprep.subr.bf16.mxu0 0
    %1793 = vmatpush2.bf16.msra.mxu0 %v1374
    %1794 = vmatprep.subr.bf16.mxu0 0
    %1795 = vmatpush2.bf16.msra.mxu0 %v1373
    %1796 = vmatprep.subr.bf16.mxu0 0
    %1797 = vmatpush2.bf16.msra.mxu0 %v1372
    %1798 = vmatprep.subr.bf16.mxu0 0
    %1799 = vmatpush2.bf16.msra.mxu0 %v1371
    %1800 = vmatprep.subr.bf16.mxu0 0
    %1801 = vmatpush2.bf16.msra.mxu0 %v1370
    %1802 = vmatprep.mubr.bf16.mxu0 %v67
    %1803 = vmatmul.mubr.bf16.gmra.mxu0 %v66
    %v1804 = vpop.f32.mrf.mxu0
    %v1805 = vadd.f32 %v1765, %v1804
    %v1806 = vpop.f32.mrf.mxu0
    %v1807 = vpop.f32.mrf.mxu0
    %v1808 = vpop.f32.mrf.mxu0
    %1809 = vdwg.mxu0
    %1810 = vmatprep.subr.bf16.mxu0 0
    %1811 = vmatpush1.bf16.msra.mxu0 %v1385
    %1812 = vmatprep.subr.bf16.mxu0 0
    %1813 = vmatpush1.bf16.msra.mxu0 %v1384
    %1814 = vmatprep.subr.bf16.mxu0 0
    %1815 = vmatpush1.bf16.msra.mxu0 %v1383
    %1816 = vmatprep.subr.bf16.mxu0 0
    %1817 = vmatpush1.bf16.msra.mxu0 %v1382
    %1818 = vmatprep.subr.bf16.mxu0 0
    %1819 = vmatpush1.bf16.msra.mxu0 %v1381
    %1820 = vmatprep.subr.bf16.mxu0 0
    %1821 = vmatpush1.bf16.msra.mxu0 %v1380
    %1822 = vmatprep.subr.bf16.mxu0 0
    %1823 = vmatpush1.bf16.msra.mxu0 %v1379
    %1824 = vmatprep.subr.bf16.mxu0 0
    %1825 = vmatpush1.bf16.msra.mxu0 %v1378
    %1826 = vmatprep.subr.bf16.mxu0 0
    %1827 = vmatpush2.bf16.msra.mxu0 %v1393
    %1828 = vmatprep.subr.bf16.mxu0 0
    %1829 = vmatpush2.bf16.msra.mxu0 %v1392
    %1830 = vmatprep.subr.bf16.mxu0 0
    %1831 = vmatpush2.bf16.msra.mxu0 %v1391
    %1832 = vmatprep.subr.bf16.mxu0 0
    %1833 = vmatpush2.bf16.msra.mxu0 %v1390
    %1834 = vmatprep.subr.bf16.mxu0 0
    %1835 = vmatpush2.bf16.msra.mxu0 %v1389
    %1836 = vmatprep.subr.bf16.mxu0 0
    %1837 = vmatpush2.bf16.msra.mxu0 %v1388
    %1838 = vmatprep.subr.bf16.mxu0 0
    %1839 = vmatpush2.bf16.msra.mxu0 %v1387
    %1840 = vmatprep.subr.bf16.mxu0 0
    %1841 = vmatpush2.bf16.msra.mxu0 %v1386
    %1842 = vmatprep.mubr.bf16.mxu0 %v69
    %1843 = vmatmul.mubr.bf16.gmra.mxu0 %v68
    %v1844 = vpop.f32.mrf.mxu0
    %v1845 = vadd.f32 %v1805, %v1844
    %v1846 = vpop.f32.mrf.mxu0
    %v1847 = vpop.f32.mrf.mxu0
    %v1848 = vpop.f32.mrf.mxu0
    %1849 = vdwg.mxu0
    %1850 = vmatprep.subr.bf16.mxu0 0
    %1851 = vmatpush1.bf16.msra.mxu0 %v1401
    %1852 = vmatprep.subr.bf16.mxu0 0
    %1853 = vmatpush1.bf16.msra.mxu0 %v1400
    %1854 = vmatprep.subr.bf16.mxu0 0
    %1855 = vmatpush1.bf16.msra.mxu0 %v1399
    %1856 = vmatprep.subr.bf16.mxu0 0
    %1857 = vmatpush1.bf16.msra.mxu0 %v1398
    %1858 = vmatprep.subr.bf16.mxu0 0
    %1859 = vmatpush1.bf16.msra.mxu0 %v1397
    %1860 = vmatprep.subr.bf16.mxu0 0
    %1861 = vmatpush1.bf16.msra.mxu0 %v1396
    %1862 = vmatprep.subr.bf16.mxu0 0
    %1863 = vmatpush1.bf16.msra.mxu0 %v1395
    %1864 = vmatprep.subr.bf16.mxu0 0
    %1865 = vmatpush1.bf16.msra.mxu0 %v1394
    %1866 = vmatprep.subr.bf16.mxu0 0
    %1867 = vmatpush2.bf16.msra.mxu0 %v1409
    %1868 = vmatprep.subr.bf16.mxu0 0
    %1869 = vmatpush2.bf16.msra.mxu0 %v1408
    %1870 = vmatprep.subr.bf16.mxu0 0
    %1871 = vmatpush2.bf16.msra.mxu0 %v1407
    %1872 = vmatprep.subr.bf16.mxu0 0
    %1873 = vmatpush2.bf16.msra.mxu0 %v1406
    %1874 = vmatprep.subr.bf16.mxu0 0
    %1875 = vmatpush2.bf16.msra.mxu0 %v1405
    %1876 = vmatprep.subr.bf16.mxu0 0
    %1877 = vmatpush2.bf16.msra.mxu0 %v1404
    %1878 = vmatprep.subr.bf16.mxu0 0
    %1879 = vmatpush2.bf16.msra.mxu0 %v1403
    %1880 = vmatprep.subr.bf16.mxu0 0
    %1881 = vmatpush2.bf16.msra.mxu0 %v1402
    %1882 = vmatprep.mubr.bf16.mxu0 %v71
    %1883 = vmatmul.mubr.bf16.gmra.mxu0 %v70
    %v1884 = vpop.f32.mrf.mxu0
    %v1885 = vadd.f32 %v1845, %v1884
    %v1886 = vpop.f32.mrf.mxu0
    %v1887 = vpop.f32.mrf.mxu0
    %v1888 = vpop.f32.mrf.mxu0
    %1889 = vdwg.mxu0
    %1890 = vmatprep.subr.bf16.mxu0 0
    %1891 = vmatpush1.bf16.msra.mxu0 %v1417
    %1892 = vmatprep.subr.bf16.mxu0 0
    %1893 = vmatpush1.bf16.msra.mxu0 %v1416
    %1894 = vmatprep.subr.bf16.mxu0 0
    %1895 = vmatpush1.bf16.msra.mxu0 %v1415
    %1896 = vmatprep.subr.bf16.mxu0 0
    %1897 = vmatpush1.bf16.msra.mxu0 %v1414
    %1898 = vmatprep.subr.bf16.mxu0 0
    %1899 = vmatpush1.bf16.msra.mxu0 %v1413
    %1900 = vmatprep.subr.bf16.mxu0 0
    %1901 = vmatpush1.bf16.msra.mxu0 %v1412
    %1902 = vmatprep.subr.bf16.mxu0 0
    %1903 = vmatpush1.bf16.msra.mxu0 %v1411
    %1904 = vmatprep.subr.bf16.mxu0 0
    %1905 = vmatpush1.bf16.msra.mxu0 %v1410
    %1906 = vmatprep.subr.bf16.mxu0 0
    %1907 = vmatpush2.bf16.msra.mxu0 %v1425
    %1908 = vmatprep.subr.bf16.mxu0 0
    %1909 = vmatpush2.bf16.msra.mxu0 %v1424
    %1910 = vmatprep.subr.bf16.mxu0 0
    %1911 = vmatpush2.bf16.msra.mxu0 %v1423
    %1912 = vmatprep.subr.bf16.mxu0 0
    %1913 = vmatpush2.bf16.msra.mxu0 %v1422
    %1914 = vmatprep.subr.bf16.mxu0 0
    %1915 = vmatpush2.bf16.msra.mxu0 %v1421
    %1916 = vmatprep.subr.bf16.mxu0 0
    %1917 = vmatpush2.bf16.msra.mxu0 %v1420
    %1918 = vmatprep.subr.bf16.mxu0 0
    %1919 = vmatpush2.bf16.msra.mxu0 %v1419
    %1920 = vmatprep.subr.bf16.mxu0 0
    %1921 = vmatpush2.bf16.msra.mxu0 %v1418
    %1922 = vmatprep.mubr.bf16.mxu0 %v73
    %1923 = vmatmul.mubr.bf16.gmra.mxu0 %v72
    %v1924 = vpop.f32.mrf.mxu0
    %v1925 = vadd.f32 %v1885, %v1924
    %v1926 = vpop.f32.mrf.mxu0
    %v1927 = vpop.f32.mrf.mxu0
    %v1928 = vpop.f32.mrf.mxu0
    %1929 = vdwg.mxu0
    %1930 = vmatprep.subr.bf16.mxu0 0
    %1931 = vmatpush1.bf16.msra.mxu0 %v1433
    %1932 = vmatprep.subr.bf16.mxu0 0
    %1933 = vmatpush1.bf16.msra.mxu0 %v1432
    %1934 = vmatprep.subr.bf16.mxu0 0
    %1935 = vmatpush1.bf16.msra.mxu0 %v1431
    %1936 = vmatprep.subr.bf16.mxu0 0
    %1937 = vmatpush1.bf16.msra.mxu0 %v1430
    %1938 = vmatprep.subr.bf16.mxu0 0
    %1939 = vmatpush1.bf16.msra.mxu0 %v1429
    %1940 = vmatprep.subr.bf16.mxu0 0
    %1941 = vmatpush1.bf16.msra.mxu0 %v1428
    %1942 = vmatprep.subr.bf16.mxu0 0
    %1943 = vmatpush1.bf16.msra.mxu0 %v1427
    %1944 = vmatprep.subr.bf16.mxu0 0
    %1945 = vmatpush1.bf16.msra.mxu0 %v1426
    %1946 = vmatprep.subr.bf16.mxu0 0
    %1947 = vmatpush2.bf16.msra.mxu0 %v1441
    %1948 = vmatprep.subr.bf16.mxu0 0
    %1949 = vmatpush2.bf16.msra.mxu0 %v1440
    %1950 = vmatprep.subr.bf16.mxu0 0
    %1951 = vmatpush2.bf16.msra.mxu0 %v1439
    %1952 = vmatprep.subr.bf16.mxu0 0
    %1953 = vmatpush2.bf16.msra.mxu0 %v1438
    %1954 = vmatprep.subr.bf16.mxu0 0
    %1955 = vmatpush2.bf16.msra.mxu0 %v1437
    %1956 = vmatprep.subr.bf16.mxu0 0
    %1957 = vmatpush2.bf16.msra.mxu0 %v1436
    %1958 = vmatprep.subr.bf16.mxu0 0
    %1959 = vmatpush2.bf16.msra.mxu0 %v1435
    %1960 = vmatprep.subr.bf16.mxu0 0
    %1961 = vmatpush2.bf16.msra.mxu0 %v1434
    %1962 = vmatprep.mubr.bf16.mxu0 %v75
    %1963 = vmatmul.mubr.bf16.gmra.mxu0 %v74
    %v1964 = vpop.f32.mrf.mxu0
    %v1965 = vadd.f32 %v1925, %v1964
    %v1966 = vpop.f32.mrf.mxu0
    %v1967 = vpop.f32.mrf.mxu0
    %v1968 = vpop.f32.mrf.mxu0
    %1969 = vdwg.mxu0
    %1970 = vmatprep.subr.bf16.mxu0 0
    %1971 = vmatpush1.bf16.msra.mxu0 %v1449
    %1972 = vmatprep.subr.bf16.mxu0 0
    %1973 = vmatpush1.bf16.msra.mxu0 %v1448
    %1974 = vmatprep.subr.bf16.mxu0 0
    %1975 = vmatpush1.bf16.msra.mxu0 %v1447
    %1976 = vmatprep.subr.bf16.mxu0 0
    %1977 = vmatpush1.bf16.msra.mxu0 %v1446
    %1978 = vmatprep.subr.bf16.mxu0 0
    %1979 = vmatpush1.bf16.msra.mxu0 %v1445
    %1980 = vmatprep.subr.bf16.mxu0 0
    %1981 = vmatpush1.bf16.msra.mxu0 %v1444
    %1982 = vmatprep.subr.bf16.mxu0 0
    %1983 = vmatpush1.bf16.msra.mxu0 %v1443
    %1984 = vmatprep.subr.bf16.mxu0 0
    %1985 = vmatpush1.bf16.msra.mxu0 %v1442
    %1986 = vmatprep.subr.bf16.mxu0 0
    %1987 = vmatpush2.bf16.msra.mxu0 %v1457
    %1988 = vmatprep.subr.bf16.mxu0 0
    %1989 = vmatpush2.bf16.msra.mxu0 %v1456
    %1990 = vmatprep.subr.bf16.mxu0 0
    %1991 = vmatpush2.bf16.msra.mxu0 %v1455
    %1992 = vmatprep.subr.bf16.mxu0 0
    %1993 = vmatpush2.bf16.msra.mxu0 %v1454
    %1994 = vmatprep.subr.bf16.mxu0 0
    %1995 = vmatpush2.bf16.msra.mxu0 %v1453
    %1996 = vmatprep.subr.bf16.mxu0 0
    %1997 = vmatpush2.bf16.msra.mxu0 %v1452
    %1998 = vmatprep.subr.bf16.mxu0 0
    %1999 = vmatpush2.bf16.msra.mxu0 %v1451
    %2000 = vmatprep.subr.bf16.mxu0 0
    %2001 = vmatpush2.bf16.msra.mxu0 %v1450
    %2002 = vmatprep.mubr.bf16.mxu0 %v77
    %2003 = vmatmul.mubr.bf16.gmra.mxu0 %v76
    %v2004 = vpop.f32.mrf.mxu0
    %v2005 = vadd.f32 %v1965, %v2004
    %v2006 = vpop.f32.mrf.mxu0
    %v2007 = vpop.f32.mrf.mxu0
    %v2008 = vpop.f32.mrf.mxu0
    %2009 = vdwg.mxu0
    %2010 = vmatprep.subr.bf16.mxu0 0
    %2011 = vmatpush1.bf16.msra.mxu0 %v1465
    %2012 = vmatprep.subr.bf16.mxu0 0
    %2013 = vmatpush1.bf16.msra.mxu0 %v1464
    %2014 = vmatprep.subr.bf16.mxu0 0
    %2015 = vmatpush1.bf16.msra.mxu0 %v1463
    %2016 = vmatprep.subr.bf16.mxu0 0
    %2017 = vmatpush1.bf16.msra.mxu0 %v1462
    %2018 = vmatprep.subr.bf16.mxu0 0
    %2019 = vmatpush1.bf16.msra.mxu0 %v1461
    %2020 = vmatprep.subr.bf16.mxu0 0
    %2021 = vmatpush1.bf16.msra.mxu0 %v1460
    %2022 = vmatprep.subr.bf16.mxu0 0
    %2023 = vmatpush1.bf16.msra.mxu0 %v1459
    %2024 = vmatprep.subr.bf16.mxu0 0
    %2025 = vmatpush1.bf16.msra.mxu0 %v1458
    %2026 = vmatprep.subr.bf16.mxu0 0
    %2027 = vmatpush2.bf16.msra.mxu0 %v1473
    %2028 = vmatprep.subr.bf16.mxu0 0
    %2029 = vmatpush2.bf16.msra.mxu0 %v1472
    %2030 = vmatprep.subr.bf16.mxu0 0
    %2031 = vmatpush2.bf16.msra.mxu0 %v1471
    %2032 = vmatprep.subr.bf16.mxu0 0
    %2033 = vmatpush2.bf16.msra.mxu0 %v1470
    %2034 = vmatprep.subr.bf16.mxu0 0
    %2035 = vmatpush2.bf16.msra.mxu0 %v1469
    %2036 = vmatprep.subr.bf16.mxu0 0
    %2037 = vmatpush2.bf16.msra.mxu0 %v1468
    %2038 = vmatprep.subr.bf16.mxu0 0
    %2039 = vmatpush2.bf16.msra.mxu0 %v1467
    %2040 = vmatprep.subr.bf16.mxu0 0
    %2041 = vmatpush2.bf16.msra.mxu0 %v1466
    %2042 = vmatprep.mubr.bf16.mxu0 %v79
    %2043 = vmatmul.mubr.bf16.gmra.mxu0 %v78
    %v2044 = vpop.f32.mrf.mxu0
    %v2045 = vadd.f32 %v2005, %v2044
    %v2046 = vpop.f32.mrf.mxu0
    %v2047 = vpop.f32.mrf.mxu0
    %v2048 = vpop.f32.mrf.mxu0
    %2049 = vdwg.mxu0
    %2050 = vmatprep.subr.bf16.mxu0 0
    %2051 = vmatpush1.bf16.msra.mxu0 %v1481
    %2052 = vmatprep.subr.bf16.mxu0 0
    %2053 = vmatpush1.bf16.msra.mxu0 %v1480
    %2054 = vmatprep.subr.bf16.mxu0 0
    %2055 = vmatpush1.bf16.msra.mxu0 %v1479
    %2056 = vmatprep.subr.bf16.mxu0 0
    %2057 = vmatpush1.bf16.msra.mxu0 %v1478
    %2058 = vmatprep.subr.bf16.mxu0 0
    %2059 = vmatpush1.bf16.msra.mxu0 %v1477
    %2060 = vmatprep.subr.bf16.mxu0 0
    %2061 = vmatpush1.bf16.msra.mxu0 %v1476
    %2062 = vmatprep.subr.bf16.mxu0 0
    %2063 = vmatpush1.bf16.msra.mxu0 %v1475
    %2064 = vmatprep.subr.bf16.mxu0 0
    %2065 = vmatpush1.bf16.msra.mxu0 %v1474
    %2066 = vmatprep.subr.bf16.mxu0 0
    %2067 = vmatpush2.bf16.msra.mxu0 %v1489
    %2068 = vmatprep.subr.bf16.mxu0 0
    %2069 = vmatpush2.bf16.msra.mxu0 %v1488
    %2070 = vmatprep.subr.bf16.mxu0 0
    %2071 = vmatpush2.bf16.msra.mxu0 %v1487
    %2072 = vmatprep.subr.bf16.mxu0 0
    %2073 = vmatpush2.bf16.msra.mxu0 %v1486
    %2074 = vmatprep.subr.bf16.mxu0 0
    %2075 = vmatpush2.bf16.msra.mxu0 %v1485
    %2076 = vmatprep.subr.bf16.mxu0 0
    %2077 = vmatpush2.bf16.msra.mxu0 %v1484
    %2078 = vmatprep.subr.bf16.mxu0 0
    %2079 = vmatpush2.bf16.msra.mxu0 %v1483
    %2080 = vmatprep.subr.bf16.mxu0 0
    %2081 = vmatpush2.bf16.msra.mxu0 %v1482
    %2082 = vmatprep.mubr.bf16.mxu0 %v81
    %2083 = vmatmul.mubr.bf16.gmra.mxu0 %v80
    %v2084 = vpop.f32.mrf.mxu0
    %v2085 = vadd.f32 %v2045, %v2084
    %v2086 = vpop.f32.mrf.mxu0
    %v2087 = vpop.f32.mrf.mxu0
    %v2088 = vpop.f32.mrf.mxu0
    %2089 = vdwg.mxu0
    %2090 = vmatprep.subr.bf16.mxu0 0
    %2091 = vmatpush1.bf16.msra.mxu0 %v1497
    %2092 = vmatprep.subr.bf16.mxu0 0
    %2093 = vmatpush1.bf16.msra.mxu0 %v1496
    %2094 = vmatprep.subr.bf16.mxu0 0
    %2095 = vmatpush1.bf16.msra.mxu0 %v1495
    %2096 = vmatprep.subr.bf16.mxu0 0
    %2097 = vmatpush1.bf16.msra.mxu0 %v1494
    %2098 = vmatprep.subr.bf16.mxu0 0
    %2099 = vmatpush1.bf16.msra.mxu0 %v1493
    %2100 = vmatprep.subr.bf16.mxu0 0
    %2101 = vmatpush1.bf16.msra.mxu0 %v1492
    %2102 = vmatprep.subr.bf16.mxu0 0
    %2103 = vmatpush1.bf16.msra.mxu0 %v1491
    %2104 = vmatprep.subr.bf16.mxu0 0
    %2105 = vmatpush1.bf16.msra.mxu0 %v1490
    %2106 = vmatprep.subr.bf16.mxu0 0
    %2107 = vmatpush2.bf16.msra.mxu0 %v1505
    %2108 = vmatprep.subr.bf16.mxu0 0
    %2109 = vmatpush2.bf16.msra.mxu0 %v1504
    %2110 = vmatprep.subr.bf16.mxu0 0
    %2111 = vmatpush2.bf16.msra.mxu0 %v1503
    %2112 = vmatprep.subr.bf16.mxu0 0
    %2113 = vmatpush2.bf16.msra.mxu0 %v1502
    %2114 = vmatprep.subr.bf16.mxu0 0
    %2115 = vmatpush2.bf16.msra.mxu0 %v1501
    %2116 = vmatprep.subr.bf16.mxu0 0
    %2117 = vmatpush2.bf16.msra.mxu0 %v1500
    %2118 = vmatprep.subr.bf16.mxu0 0
    %2119 = vmatpush2.bf16.msra.mxu0 %v1499
    %2120 = vmatprep.subr.bf16.mxu0 0
    %2121 = vmatpush2.bf16.msra.mxu0 %v1498
    %2122 = vmatprep.mubr.bf16.mxu0 %v83
    %2123 = vmatmul.mubr.bf16.gmra.mxu0 %v82
    %v2124 = vpop.f32.mrf.mxu0
    %v2125 = vadd.f32 %v2085, %v2124
    %v2126 = vpop.f32.mrf.mxu0
    %v2127 = vpop.f32.mrf.mxu0
    %v2128 = vpop.f32.mrf.mxu0
    %2129 = vdwg.mxu0
    %2130 = vmatprep.subr.bf16.mxu0 0
    %2131 = vmatpush1.bf16.msra.mxu0 %v1513
    %2132 = vmatprep.subr.bf16.mxu0 0
    %2133 = vmatpush1.bf16.msra.mxu0 %v1512
    %2134 = vmatprep.subr.bf16.mxu0 0
    %2135 = vmatpush1.bf16.msra.mxu0 %v1511
    %2136 = vmatprep.subr.bf16.mxu0 0
    %2137 = vmatpush1.bf16.msra.mxu0 %v1510
    %2138 = vmatprep.subr.bf16.mxu0 0
    %2139 = vmatpush1.bf16.msra.mxu0 %v1509
    %2140 = vmatprep.subr.bf16.mxu0 0
    %2141 = vmatpush1.bf16.msra.mxu0 %v1508
    %2142 = vmatprep.subr.bf16.mxu0 0
    %2143 = vmatpush1.bf16.msra.mxu0 %v1507
    %2144 = vmatprep.subr.bf16.mxu0 0
    %2145 = vmatpush1.bf16.msra.mxu0 %v1506
    %2146 = vmatprep.subr.bf16.mxu0 0
    %2147 = vmatpush2.bf16.msra.mxu0 %v1521
    %2148 = vmatprep.subr.bf16.mxu0 0
    %2149 = vmatpush2.bf16.msra.mxu0 %v1520
    %2150 = vmatprep.subr.bf16.mxu0 0
    %2151 = vmatpush2.bf16.msra.mxu0 %v1519
    %2152 = vmatprep.subr.bf16.mxu0 0
    %2153 = vmatpush2.bf16.msra.mxu0 %v1518
    %2154 = vmatprep.subr.bf16.mxu0 0
    %2155 = vmatpush2.bf16.msra.mxu0 %v1517
    %2156 = vmatprep.subr.bf16.mxu0 0
    %2157 = vmatpush2.bf16.msra.mxu0 %v1516
    %2158 = vmatprep.subr.bf16.mxu0 0
    %2159 = vmatpush2.bf16.msra.mxu0 %v1515
    %2160 = vmatprep.subr.bf16.mxu0 0
    %2161 = vmatpush2.bf16.msra.mxu0 %v1514
    %2162 = vmatprep.mubr.bf16.mxu0 %v85
    %2163 = vmatmul.mubr.bf16.gmra.mxu0 %v84
    %v2164 = vpop.f32.mrf.mxu0
    %v2165 = vadd.f32 %v2125, %v2164
    %v2166 = vpop.f32.mrf.mxu0
    %v2167 = vpop.f32.mrf.mxu0
    %v2168 = vpop.f32.mrf.mxu0
    %2169 = vdwg.mxu0
    %2170 = vmatprep.subr.bf16.mxu0 0
    %2171 = vmatpush1.bf16.msra.mxu0 %v1529
    %2172 = vmatprep.subr.bf16.mxu0 0
    %2173 = vmatpush1.bf16.msra.mxu0 %v1528
    %2174 = vmatprep.subr.bf16.mxu0 0
    %2175 = vmatpush1.bf16.msra.mxu0 %v1527
    %2176 = vmatprep.subr.bf16.mxu0 0
    %2177 = vmatpush1.bf16.msra.mxu0 %v1526
    %2178 = vmatprep.subr.bf16.mxu0 0
    %2179 = vmatpush1.bf16.msra.mxu0 %v1525
    %2180 = vmatprep.subr.bf16.mxu0 0
    %2181 = vmatpush1.bf16.msra.mxu0 %v1524
    %2182 = vmatprep.subr.bf16.mxu0 0
    %2183 = vmatpush1.bf16.msra.mxu0 %v1523
    %2184 = vmatprep.subr.bf16.mxu0 0
    %2185 = vmatpush1.bf16.msra.mxu0 %v1522
    %2186 = vmatprep.subr.bf16.mxu0 0
    %2187 = vmatpush2.bf16.msra.mxu0 %v1537
    %2188 = vmatprep.subr.bf16.mxu0 0
    %2189 = vmatpush2.bf16.msra.mxu0 %v1536
    %2190 = vmatprep.subr.bf16.mxu0 0
    %2191 = vmatpush2.bf16.msra.mxu0 %v1535
    %2192 = vmatprep.subr.bf16.mxu0 0
    %2193 = vmatpush2.bf16.msra.mxu0 %v1534
    %2194 = vmatprep.subr.bf16.mxu0 0
    %2195 = vmatpush2.bf16.msra.mxu0 %v1533
    %2196 = vmatprep.subr.bf16.mxu0 0
    %2197 = vmatpush2.bf16.msra.mxu0 %v1532
    %2198 = vmatprep.subr.bf16.mxu0 0
    %2199 = vmatpush2.bf16.msra.mxu0 %v1531
    %2200 = vmatprep.subr.bf16.mxu0 0
    %2201 = vmatpush2.bf16.msra.mxu0 %v1530
    %2202 = vmatprep.mubr.bf16.mxu0 %v87
    %2203 = vmatmul.mubr.bf16.gmra.mxu0 %v86
    %v2204 = vpop.f32.mrf.mxu0
    %v2205 = vadd.f32 %v2165, %v2204
    %v2206 = vpop.f32.mrf.mxu0
    %v2207 = vpop.f32.mrf.mxu0
    %v2208 = vpop.f32.mrf.mxu0
    %2209 = vdwg.mxu0
    %v2210 = vld [vmem:[%s4] sm:$0x1]
    %v2212 = vlaneseq
    %v2213 = vshrl.u32 %v2212, 7
    %v2214 = vsub.s32 0, %v2213
    %v2215 = vrot.slane %v2210, %v2214
    %v2217 = vadd.f32 %v2205, %v2215
    %v2218 = vtanh.pop %v2217
    %v2219 = vpack.c.bf16 %v2218, %v2218
    %v2220 = vld [vmem:[%s5] sm:$0xff]
    %v2221 = vld [vmem:[%s5 + $0x8] sm:$0xff]
    %v2222 = vld [vmem:[%s5 + $0x10] sm:$0xff]
    %v2223 = vld [vmem:[%s5 + $0x18] sm:$0xff]
    %v2224 = vld [vmem:[%s6] sm:$0x3]
    %v2226 = vlaneseq
    %v2227 = vshrl.u32 %v2226, 7
    %v2228 = vsub.s32 0, %v2227
    %v2229 = vrot.slane %v2224, %v2228
    %v2230 = vlaneseq
    %v2231 = vshrl.u32 %v2230, 7
    %v2232 = vsub.s32 1, %v2231
    %v2233 = vrot.slane %v2224, %v2232
    %v2240 = vunpack.c.l.b16 %v2220
    %v2241 = vunpack.c.h.b16 %v2220
    %v2242 = vunpack.c.l.b16 %v2221
    %v2243 = vunpack.c.h.b16 %v2221
    %v2244 = vunpack.c.l.b16 %v2222
    %v2245 = vunpack.c.h.b16 %v2222
    %v2246 = vunpack.c.l.b16 %v2223
    %v2247 = vunpack.c.h.b16 %v2223
    %v2248 = vpack.c.b16 %v2242, %v2240
    %v2249 = vpack.c.b16 %v2243, %v2241
    %v2250 = vpack.c.b16 %v2246, %v2244
    %v2251 = vpack.c.b16 %v2247, %v2245
    %vm2256 = vcmask 261120
    %v2258 = vsel %vm2256, %v2219, 0
    %2260 = vmatprep.subr.bf16.mxu0 0
    %2261 = vmatpush1.bf16.msra.mxu0 0
    %2262 = vmatprep.subr.bf16.mxu0 0
    %2263 = vmatpush1.bf16.msra.mxu0 0
    %2264 = vmatprep.subr.bf16.mxu0 0
    %2265 = vmatpush1.bf16.msra.mxu0 0
    %2266 = vmatprep.subr.bf16.mxu0 0
    %2267 = vmatpush1.bf16.msra.mxu0 0
    %2268 = vmatprep.subr.bf16.mxu0 0
    %2269 = vmatpush1.bf16.msra.mxu0 0
    %2270 = vmatprep.subr.bf16.mxu0 0
    %2271 = vmatpush1.bf16.msra.mxu0 0
    %2272 = vmatprep.subr.bf16.mxu0 %v2251
    %2273 = vmatpush1.bf16.msra.mxu0 %v2250
    %2274 = vmatprep.subr.bf16.mxu0 %v2249
    %2275 = vmatpush1.bf16.msra.mxu0 %v2248
    %2276 = vmatprep.subr.bf16.mxu0 0
    %2277 = vmatpush2.bf16.msra.mxu0 0
    %2278 = vmatprep.subr.bf16.mxu0 0
    %2279 = vmatpush2.bf16.msra.mxu0 0
    %2280 = vmatprep.subr.bf16.mxu0 0
    %2281 = vmatpush2.bf16.msra.mxu0 0
    %2282 = vmatprep.subr.bf16.mxu0 0
    %2283 = vmatpush2.bf16.msra.mxu0 0
    %2284 = vmatprep.subr.bf16.mxu0 0
    %2285 = vmatpush2.bf16.msra.mxu0 0
    %2286 = vmatprep.subr.bf16.mxu0 0
    %2287 = vmatpush2.bf16.msra.mxu0 0
    %2288 = vmatprep.subr.bf16.mxu0 0
    %2289 = vmatpush2.bf16.msra.mxu0 0
    %2290 = vmatprep.subr.bf16.mxu0 0
    %2291 = vmatpush2.bf16.msra.mxu0 0
    %2292 = vmatprep.mubr.bf16.mxu0 0
    %2293 = vmatmul.mubr.bf16.gmra.mxu0 %v2258
    %v2294 = vpop.f32.mrf.mxu0
    %v2295 = vadd.f32 %v2229, %v2294
    %v2296 = vpop.f32.mrf.mxu0
    %v2297 = vadd.f32 %v2233, %v2296
    %v2298 = vpop.f32.mrf.mxu0
    %v2299 = vpop.f32.mrf.mxu0
    %2300 = vdwg.mxu0
    %v2301 = vmul.f32 %v2295, 0.5
    %v2302 = vmul.f32 %v2297, 0.5
    %v2303 = vmul.f32 %v2295, 0.044715
    %v2304 = vmul.f32 %v2297, 0.044715
    %v2305 = vmul.f32 %v2303, %v2295
    %v2306 = vmul.f32 %v2304, %v2297
    %v2307 = vmul.f32 %v2305, %v2295
    %v2308 = vmul.f32 %v2306, %v2297
    %v2309 = vadd.f32 %v2295, %v2307
    %v2310 = vadd.f32 %v2297, %v2308
    %v2311 = vmul.f32 %v2309, 0.7978846
    %v2312 = vmul.f32 %v2310, 0.7978846
    %v2313 = vtanh.pop %v2311
    %v2314 = vtanh.pop %v2312
    %v2315 = vadd.f32 %v2313, 1.0
    %v2316 = vadd.f32 %v2314, 1.0
    %v2317 = vmul.f32 %v2301, %v2315
    %v2318 = vmul.f32 %v2302, %v2316
    %v2319 = vpack.c.bf16 %v2317, %v2317
    %v2320 = vpack.c.bf16 %v2318, %v2318
    %v2321 = vld [vmem:[%s7] sm:$0xf]
    %v2322 = vld [vmem:[%s7 + $0x4] sm:$0xf]
    %v2323 = vld [vmem:[%s7 + $0x8] sm:$0xf]
    %v2324 = vld [vmem:[%s7 + $0xc] sm:$0xf]
    %v2325 = vld [vmem:[%s7 + $0x10] sm:$0xf]
    %v2326 = vld [vmem:[%s7 + $0x14] sm:$0xf]
    %v2327 = vld [vmem:[%s7 + $0x18] sm:$0xf]
    %v2328 = vld [vmem:[%s7 + $0x1c] sm:$0xf]
    %v2329 = vld [vmem:[%s7 + $0x20] sm:$0xf]
    %v2330 = vld [vmem:[%s7 + $0x24] sm:$0xf]
    %v2331 = vld [vmem:[%s7 + $0x28] sm:$0xf]
    %v2332 = vld [vmem:[%s7 + $0x2c] sm:$0xf]
    %v2333 = vld [vmem:[%s7 + $0x30] sm:$0xf]
    %v2334 = vld [vmem:[%s7 + $0x34] sm:$0xf]
    %v2335 = vld [vmem:[%s7 + $0x38] sm:$0xf]
    %v2336 = vld [vmem:[%s7 + $0x3c] sm:$0xf]
    %v2337 = vld [vmem:[%s7 + $0x40] sm:$0xf]
    %v2338 = vld [vmem:[%s7 + $0x44] sm:$0xf]
    %v2339 = vld [vmem:[%s7 + $0x48] sm:$0xf]
    %v2340 = vld [vmem:[%s7 + $0x4c] sm:$0xf]
    %v2341 = vld [vmem:[%s7 + $0x50] sm:$0xf]
    %v2342 = vld [vmem:[%s7 + $0x54] sm:$0xf]
    %v2343 = vld [vmem:[%s7 + $0x58] sm:$0xf]
    %v2344 = vld [vmem:[%s7 + $0x5c] sm:$0xf]
    %v2345 = vld [vmem:[%s7 + $0x60] sm:$0xf]
    %v2346 = vld [vmem:[%s7 + $0x64] sm:$0xf]
    %v2347 = vld [vmem:[%s7 + $0x68] sm:$0xf]
    %v2348 = vld [vmem:[%s7 + $0x6c] sm:$0xf]
    %v2349 = vld [vmem:[%s7 + $0x70] sm:$0xf]
    %v2350 = vld [vmem:[%s7 + $0x74] sm:$0xf]
    %v2351 = vld [vmem:[%s7 + $0x78] sm:$0xf]
    %v2352 = vld [vmem:[%s7 + $0x7c] sm:$0xf]
    %v2353 = vld [vmem:[%s8] sm:$0x1]
    %v2355 = vlaneseq
    %v2356 = vshrl.u32 %v2355, 7
    %v2357 = vsub.s32 0, %v2356
    %v2358 = vrot.slane %v2353, %v2357
    %v2392 = vunpack.c.l.b16 %v2321
    %v2393 = vunpack.c.l.b16 %v2322
    %v2394 = vunpack.c.l.b16 %v2323
    %v2395 = vunpack.c.l.b16 %v2324
    %v2396 = vunpack.c.l.b16 %v2325
    %v2397 = vunpack.c.l.b16 %v2326
    %v2398 = vunpack.c.l.b16 %v2327
    %v2399 = vunpack.c.l.b16 %v2328
    %v2400 = vunpack.c.l.b16 %v2329
    %v2401 = vunpack.c.l.b16 %v2330
    %v2402 = vunpack.c.l.b16 %v2331
    %v2403 = vunpack.c.l.b16 %v2332
    %v2404 = vunpack.c.l.b16 %v2333
    %v2405 = vunpack.c.l.b16 %v2334
    %v2406 = vunpack.c.l.b16 %v2335
    %v2407 = vunpack.c.l.b16 %v2336
    %v2408 = vunpack.c.l.b16 %v2337
    %v2409 = vunpack.c.l.b16 %v2338
    %v2410 = vunpack.c.l.b16 %v2339
    %v2411 = vunpack.c.l.b16 %v2340
    %v2412 = vunpack.c.l.b16 %v2341
    %v2413 = vunpack.c.l.b16 %v2342
    %v2414 = vunpack.c.l.b16 %v2343
    %v2415 = vunpack.c.l.b16 %v2344
    %v2416 = vunpack.c.l.b16 %v2345
    %v2417 = vunpack.c.l.b16 %v2346
    %v2418 = vunpack.c.l.b16 %v2347
    %v2419 = vunpack.c.l.b16 %v2348
    %v2420 = vunpack.c.l.b16 %v2349
    %v2421 = vunpack.c.l.b16 %v2350
    %v2422 = vunpack.c.l.b16 %v2351
    %v2423 = vunpack.c.l.b16 %v2352
    %v2424 = vpack.c.b16 %v2393, %v2392
    %v2425 = vpack.c.b16 %v2395, %v2394
    %v2426 = vpack.c.b16 %v2397, %v2396
    %v2427 = vpack.c.b16 %v2399, %v2398
    %v2428 = vpack.c.b16 %v2401, %v2400
    %v2429 = vpack.c.b16 %v2403, %v2402
    %v2430 = vpack.c.b16 %v2405, %v2404
    %v2431 = vpack.c.b16 %v2407, %v2406
    %v2432 = vpack.c.b16 %v2409, %v2408
    %v2433 = vpack.c.b16 %v2411, %v2410
    %v2434 = vpack.c.b16 %v2413, %v2412
    %v2435 = vpack.c.b16 %v2415, %v2414
    %v2436 = vpack.c.b16 %v2417, %v2416
    %v2437 = vpack.c.b16 %v2419, %v2418
    %v2438 = vpack.c.b16 %v2421, %v2420
    %v2439 = vpack.c.b16 %v2423, %v2422
    %2456 = vmatprep.subr.bf16.mxu0 0
    %2457 = vmatpush1.bf16.msra.mxu0 %v2431
    %2458 = vmatprep.subr.bf16.mxu0 0
    %2459 = vmatpush1.bf16.msra.mxu0 %v2430
    %2460 = vmatprep.subr.bf16.mxu0 0
    %2461 = vmatpush1.bf16.msra.mxu0 %v2429
    %2462 = vmatprep.subr.bf16.mxu0 0
    %2463 = vmatpush1.bf16.msra.mxu0 %v2428
    %2464 = vmatprep.subr.bf16.mxu0 0
    %2465 = vmatpush1.bf16.msra.mxu0 %v2427
    %2466 = vmatprep.subr.bf16.mxu0 0
    %2467 = vmatpush1.bf16.msra.mxu0 %v2426
    %2468 = vmatprep.subr.bf16.mxu0 0
    %2469 = vmatpush1.bf16.msra.mxu0 %v2425
    %2470 = vmatprep.subr.bf16.mxu0 0
    %2471 = vmatpush1.bf16.msra.mxu0 %v2424
    %2472 = vmatprep.subr.bf16.mxu0 0
    %2473 = vmatpush2.bf16.msra.mxu0 %v2439
    %2474 = vmatprep.subr.bf16.mxu0 0
    %2475 = vmatpush2.bf16.msra.mxu0 %v2438
    %2476 = vmatprep.subr.bf16.mxu0 0
    %2477 = vmatpush2.bf16.msra.mxu0 %v2437
    %2478 = vmatprep.subr.bf16.mxu0 0
    %2479 = vmatpush2.bf16.msra.mxu0 %v2436
    %2480 = vmatprep.subr.bf16.mxu0 0
    %2481 = vmatpush2.bf16.msra.mxu0 %v2435
    %2482 = vmatprep.subr.bf16.mxu0 0
    %2483 = vmatpush2.bf16.msra.mxu0 %v2434
    %2484 = vmatprep.subr.bf16.mxu0 0
    %2485 = vmatpush2.bf16.msra.mxu0 %v2433
    %2486 = vmatprep.subr.bf16.mxu0 0
    %2487 = vmatpush2.bf16.msra.mxu0 %v2432
    %2488 = vmatprep.mubr.bf16.mxu0 %v2320
    %2489 = vmatmul.mubr.bf16.gmra.mxu0 %v2319
    %v2490 = vpop.f32.mrf.mxu0
    %v2491 = vadd.f32 %v2358, %v2490
    %v2492 = vpop.f32.mrf.mxu0
    %v2493 = vpop.f32.mrf.mxu0
    %v2494 = vpop.f32.mrf.mxu0
    %2495 = vdwg.mxu0
    %2496 = vst [vmem:[#allocation2] sm:$0xff] %v2491
    %v2497 = vld [vmem:[%s9] sm:$0xff]
    %v2498 = vsub.f32 %v2491, %v2497
    %v2499 = vlaneseq
    %v2500 = vand.u32 %v2499, 127
    %v2501 = vlaneseq
    %v2502 = vshrl.u32 %v2501, 7
    %s2503 = smul.u32 0, 8
    %v2504 = vstv %s2503
    %v2505 = vadd.s32 %v2502, %v2504
    %vm2506 = vcmp.lt.s32.totalorder %v2500, 24
    %vm2507 = vcmp.lt.s32.totalorder %v2500, 26
    %v2508 = vsel %vm2507, 0.5, 0.0
    %v2509 = vsel %vm2506, 0.020833334, %v2508
    %v2510 = vand.u32 2147483647, %v2498
    %v2511 = vmul.f32 %v2498, %v2498
    %v2512 = vsel %vm2506, %v2510, %v2511
    %vm2513 = vcmp.lt.s32.totalorder %v2505, 2
    %v2514 = vmul.f32 %v2509, %v2512
    %v2515 = vsel %vm2513, %v2514, 0.0
    %2516 = vadd.xlane.f32.xlu0 %v2515
    %v2517 = vpop.xlane.xlu0 %2516
    %v2518 = vrot.slane %v2517, 4
    %v2519 = vadd.f32 %v2517, %v2518
    %v2520 = vrot.slane %v2519, 2
    %v2521 = vadd.f32 %v2519, %v2520
    %v2522 = vrot.slane %v2521, 1
    %v2523 = vadd.f32 %v2521, %v2522
    %s2524 = vtos %v2523
    %v2525 = vstv %s2524
    %2526 = vst [vmem:[#allocation4] sm:$0x1] %v2525
    // Predicated region
    $region42: #{tpu_custom_call.1} parent=1 // pred_check
      _
    $region43: #{tpu_custom_call.1} parent=1 // pred_check_branch
      %2528 = sbr.rel (0) target = $region45
    $region44: #{tpu_custom_call.1} parent=1 // pred_region
      %s2530 = ssub.s32 128, 128
      %2531 = vsyncadd [#allocation3], %s2530
      %s2533 = sshll.u32 [#allocation2], 4
      %s2534 = int_to_ptr.vmem [resolvable:$true] %s2533
      %2536 = dma.vmem_to_hbm [thread:$0]  %s2534, 128, %s10, [#allocation3]
    $region45: #{tpu_custom_call.1} parent=1 // pred_fallthru
      _
    // Predicated region
    $region46: #{tpu_custom_call.1} parent=1 // pred_check
      _
    $region47: #{tpu_custom_call.1} parent=1 // pred_check_branch
      %2538 = sbr.rel (0) target = $region49
    $region48: #{tpu_custom_call.1} parent=1 // pred_region
      %s2540 = ssub.s32 16, 16
      %2541 = vsyncadd [#allocation5], %s2540
      %s2543 = sshll.u32 [#allocation4], 4
      %s2544 = int_to_ptr.vmem [resolvable:$true] %s2543
      %2546 = dma.vmem_to_hbm [thread:$0]  %s2544, 16, %s11, [#allocation5]
    $region49: #{tpu_custom_call.1} parent=1 // pred_fallthru
      _
    // Predicated region
    $region50: #{tpu_custom_call.1} parent=1 // pred_check
      _
    $region51: #{tpu_custom_call.1} parent=1 // pred_check_branch
      %2548 = sbr.rel (0) target = $region53
    $region52: #{tpu_custom_call.1} parent=1 // pred_region
      %2549 = dma.done [#allocation3], 128
    $region53: #{tpu_custom_call.1} parent=1 // pred_fallthru
      _
    // Predicated region
    $region54: #{tpu_custom_call.1} parent=1 // pred_check
      _
    $region55: #{tpu_custom_call.1} parent=1 // pred_check_branch
      %2551 = sbr.rel (0) target = $region57
    $region56: #{tpu_custom_call.1} parent=1 // pred_region
      %2552 = dma.done [#allocation5], 16
    $region57: #{tpu_custom_call.1} parent=1 // pred_fallthru
      _
    %2553 = vsyncpa [#allocation3], 1
    %2554 = vsyncpa [#allocation5], 1

</llo_original>
